<compile_context>
chip_gen: v7x
topology: tpu7x:2x2x1
jax: 0.10.0
libtpu: 0.0.40
codegen_flags: <defaults>
</compile_context>

<pallas_src>
import jax
import jax.numpy as jnp
from jax.experimental import pallas as pl
from jax.experimental.pallas import tpu as pltpu

BN_EPS = 1e-5


def _activation_fn(name):
    return {
        'relu':       lambda v: jnp.maximum(v, 0.0),
        'sigmoid':    jax.nn.sigmoid,
        'softplus':   jax.nn.softplus,
        'logsigmoid': jax.nn.log_sigmoid,
        'softsign':   jax.nn.soft_sign,
        'tanh':       jnp.tanh,
    }[name]


def _default_mxu_dtype():
    """Every TPU MXU (v4/v5e/v5p/v6e/v7x) is bf16-native; f32 operands force
    multi-pass MXU execution.  Keep bf16 matmul inputs on all TPUs; BN stats and
    elementwise math stay f32 (also right on v5e, which has no bf16 VPU/EUP)."""
    try:
        if jax.devices()[0].platform == 'tpu':
            return jnp.bfloat16
    except Exception:
        pass
    return jnp.float32


def _make_kernel(B, n_valid, n_pad, num_layers, activation, mxu_dtype):
    act = _activation_fn(activation)
    inv_m = 1.0 / float(B * n_valid)    # training-mode BN: biased variance over (B, N)
    padded = n_pad != n_valid

    def bn_act(h, gamma_beta, mask):
        # h: (C, B*n_pad) f32, gamma_beta: (2, C) f32.  Single-pass stats + fused
        # affine + activation; result cast to mxu_dtype for the next matmul.
        s1 = jnp.sum(h, axis=1, keepdims=True)              # (C, 1)
        s2 = jnp.sum(h * h, axis=1, keepdims=True)          # (C, 1)
        mean = s1 * inv_m
        var = jnp.maximum(s2 * inv_m - mean * mean, 0.0)    # clamp cancellation error
        scale = gamma_beta[0][:, None] * jax.lax.rsqrt(var + BN_EPS)
        shift = gamma_beta[1][:, None] - mean * scale
        out = act(h * scale + shift)
        if mask is not None:
            out = out * mask        # keep padded lanes exactly zero for the next layer
        return out.astype(mxu_dtype)

    def kernel(x_ref, lat_ref, w1_ref, w2_ref, *rest):
        if num_layers > 0:
            wh_ref, wl_ref, bn1_ref, bnh_ref, bl_ref, o_ref = rest
        else:
            wl_ref, bn1_ref, bnh_ref, bl_ref, o_ref = rest
            wh_ref = None

        mask = None
        if padded:
            col = jax.lax.broadcasted_iota(jnp.int32, (1, B * n_pad), 1)
            mask = ((col % n_pad) < n_valid).astype(jnp.float32)   # (1, B*n_pad)

        # --- conv1 (+ latent bias), bn1, activation ------------------------------
        # Fold the batch into the lane axis: W1(bottleneck, Cin) @ x_b(Cin, n_pad)
        # per batch, concatenated along 128-aligned lane blocks (stays in vregs,
        # no VMEM scratch round-trip).  conv1's own bias is dropped (cancelled
        # exactly by the training-mode BN batch mean).
        w1 = w1_ref[...]                                    # (bottleneck, Cin) mxu_dtype
        blocks = [jnp.dot(w1, x_ref[b], preferred_element_type=jnp.float32) + lat_ref[b]
                  for b in range(B)]
        h = jnp.concatenate(blocks, axis=1)                 # (bottleneck, B*n_pad) f32
        if mask is not None:
            h = h * mask                                    # padded lanes -> 0 before stats
        h = bn_act(h, bn1_ref[...], mask)

        # --- conv2, bn2, activation (bias dropped, dead under training BN) -------
        h = jnp.dot(w2_ref[...], h, preferred_element_type=jnp.float32)
        h = bn_act(h, bnh_ref[0], mask)

        # --- hidden conv_list / bn_list layers (biases dropped) ------------------
        for i in range(num_layers):
            h = jnp.dot(wh_ref[i], h, preferred_element_type=jnp.float32)
            h = bn_act(h, bnh_ref[i + 1], mask)

        # --- last_conv (bias kept; no BN, no activation) --------------------------
        h = jnp.dot(wl_ref[...], h, preferred_element_type=jnp.float32)   # (3, B*n_pad)
        h = h + bl_ref[...]                                               # (3, 1) bias

        # Un-fold the batch: (3, B*n_pad) -> (B, 3, n_pad); 128-aligned lane slices.
        for b in range(B):
            o_ref[b] = h[:, b * n_pad:(b + 1) * n_pad].astype(o_ref.dtype)

    return kernel


def pack_params(params, mxu_dtype):
    """Pack torch-style per-layer params into a few stacked kernel arrays."""
    w1 = params['conv1'][0][:, :, 0].astype(mxu_dtype)            # (bottleneck, Cin)
    w2 = params['conv2'][0][:, :, 0].astype(mxu_dtype)            # (hidden, bottleneck)
    wl = params['last_conv'][0][:, :, 0].astype(mxu_dtype)        # (3, hidden)
    bl = params['last_conv'][1][:, None].astype(jnp.float32)      # (3, 1)
    bn1 = jnp.stack(params['bn1']).astype(jnp.float32)            # (2, bottleneck)
    bn_rest = [jnp.stack(params['bn2'])] + [jnp.stack(gb) for gb in params['bn_list']]
    bnh = jnp.stack(bn_rest).astype(jnp.float32)                  # (num_layers+1, 2, hidden)
    wh = None
    if params['conv_list']:
        wh = jnp.stack([W[:, :, 0] for W, _ in params['conv_list']]).astype(mxu_dtype)
    # conv1/conv2/conv_list biases are intentionally NOT packed — they are exactly
    # cancelled by the training-mode BatchNorm that follows each of them.
    return w1, w2, wh, wl, bn1, bnh, bl


def _derive_vmem_limit(B, cin, bottleneck, hidden, n_pad, num_layers, mxu_dtype):
    """Footprint-derived VMEM budget, clipped to the device's physical VMEM."""
    eb = jnp.dtype(mxu_dtype).itemsize
    cols = B * n_pad
    c_max = max(bottleneck, hidden)
    param_bytes = ((bottleneck * cin + hidden * bottleneck
                    + num_layers * hidden * hidden + 3 * hidden) * eb
                   + (2 * bottleneck + (num_layers + 1) * 2 * hidden + 3
                      + B * bottleneck) * 4)
    io_bytes = B * cin * n_pad * eb + B * 3 * n_pad * 4
    act_bytes = c_max * cols * (2 * 4 + 2 * eb)   # ~two live f32 slabs + mxu copies
    footprint = param_bytes + io_bytes + act_bytes
    try:
        info = pltpu.get_tpu_info()
        cap = int(getattr(info, 'vmem_capacity_bytes', 0)) or (64 << 20)
    except Exception:
        cap = 64 << 20                            # v7x lower bound (64 MiB per TC)
    return int(min(max(2 * footprint + (8 << 20), 32 << 20), int(cap * 0.85)))


def mlp_core_forward(x_ncw, latent_nc1, params, num_layers, activation='relu',
                     mxu_dtype=None):
    """x_ncw: (B, Cin, N)   latent_nc1: (B, bottleneck, 1)   returns (B, 3, N) f32."""
    if mxu_dtype is None:
        mxu_dtype = _default_mxu_dtype()
    B, Cin, N = x_ncw.shape
    bottleneck = latent_nc1.shape[1]
    hidden = params['conv2'][0].shape[0]

    # Lane-align the point axis so every fold/unfold slice and store is unmasked.
    n_pad = ((N + 127) // 128) * 128
    x_in = x_ncw.astype(mxu_dtype)
    if n_pad != N:
        x_in = jnp.pad(x_in, ((0, 0), (0, 0), (0, n_pad - N)))

    w1, w2, wh, wl, bn1, bnh, bl = pack_params(params, mxu_dtype)
    inputs = [x_in, latent_nc1.astype(jnp.float32), w1, w2]
    if wh is not None:
        inputs.append(wh)
    inputs += [wl, bn1, bnh, bl]

    kernel = _make_kernel(B, N, n_pad, num_layers, activation, mxu_dtype)
    out = pl.pallas_call(
        kernel,
        out_shape=jax.ShapeDtypeStruct((B, 3, n_pad), jnp.float32),
        in_specs=[pl.BlockSpec(memory_space=pltpu.MemorySpace.VMEM)] * len(inputs),
        out_specs=pl.BlockSpec(memory_space=pltpu.MemorySpace.VMEM),
        compiler_params=pltpu.CompilerParams(
            vmem_limit_bytes=_derive_vmem_limit(B, Cin, bottleneck, hidden, n_pad,
                                                num_layers, mxu_dtype)),
    )(*inputs)
    return out if n_pad == N else out[:, :, :N]


def make_params(key, dim_template, bottleneck, hidden, num_layers):
    """Deterministic synthetic params with torch-faithful shapes (Conv1d W is (out,in,1))."""
    def conv(k, cin, cout):
        k1, k2 = jax.random.split(k)
        W = jax.random.normal(k1, (cout, cin, 1), jnp.float32) * 0.2
        b = jax.random.normal(k2, (cout,), jnp.float32) * 0.05
        return W, b

    def bn(k, c):
        k1, k2 = jax.random.split(k)
        g = 1.0 + 0.1 * jax.random.normal(k1, (c,), jnp.float32)
        be = 0.1 * jax.random.normal(k2, (c,), jnp.float32)
        return g, be

    keys = iter(jax.random.split(key, 2 * (num_layers + 2) + 1))
    p = {
        'conv1': conv(next(keys), dim_template, bottleneck),
        'bn1': bn(next(keys), bottleneck),
        'conv2': conv(next(keys), bottleneck, hidden),
        'bn2': bn(next(keys), hidden),
        'conv_list': [],
        'bn_list': [],
    }
    for _ in range(num_layers):
        p['conv_list'].append(conv(next(keys), hidden, hidden))
        p['bn_list'].append(bn(next(keys), hidden))
    p['last_conv'] = conv(next(keys), hidden, 3)
    return p


def reference_forward(x_ncw, latent_nc1, params, num_layers, activation='relu',
                      mxu_dtype=jnp.float32):
    """Pure-jnp mirror of the torch module (training-mode BN, all conv biases kept)."""
    act = _activation_fn(activation)

    def conv1d(h, W, b):  # h: (B, C, N), W: (out, in, 1), b: (out,)
        out = jnp.einsum('oc,bcn->bon', W[:, :, 0].astype(mxu_dtype),
                         h.astype(mxu_dtype), preferred_element_type=jnp.float32)
        return out + b[None, :, None]

    def bn_train(h, g, be):
        mean = jnp.mean(h, axis=(0, 2), keepdims=True)
        var = jnp.mean((h - mean) ** 2, axis=(0, 2), keepdims=True)
        return (h - mean) * jax.lax.rsqrt(var + BN_EPS) * g[None, :, None] + be[None, :, None]

    x = x_ncw.astype(jnp.float32)
    W, b = params['conv1']
    g, be = params['bn1']
    h = conv1d(x, W, b) + latent_nc1
    h = act(bn_train(h, g, be))
    W, b = params['conv2']
    g, be = params['bn2']
    h = act(bn_train(conv1d(h, W, b), g, be))
    for i in range(num_layers):
        W, b = params['conv_list'][i]
        g, be = params['bn_list'][i]
        h = act(bn_train(conv1d(h, W, b), g, be))
    W, b = params['last_conv']
    return conv1d(h, W, b)


if __name__ == "__main__":
    # Small hparams consistent with the module:
    #   dim_template=3, bottleneck_size=32, hidden_neurons=32, num_layers=2, activation='relu'
    B = 2
    DIM_TEMPLATE, BOTTLENECK, HIDDEN, NUM_LAYERS = 3, 32, 32, 2
    ACT = 'relu'

    key = jax.random.PRNGKey(0)
    kx, kl, kp = jax.random.split(key, 3)
    params = make_params(kp, DIM_TEMPLATE, BOTTLENECK, HIDDEN, NUM_LAYERS)

    # Strict f32 semantic checks: lane-aligned path (N=128) and padded path (N=90).
    for N in (128, 90):
        kx_n, kl_n = jax.random.split(jax.random.fold_in(kx, N))
        x = jax.random.normal(kx_n, (B, DIM_TEMPLATE, N), jnp.float32)      # NCW, like torch
        latent = jax.random.normal(kl_n, (B, BOTTLENECK, 1), jnp.float32)   # latent bias
        out = jax.block_until_ready(
            mlp_core_forward(x, latent, params, NUM_LAYERS, ACT, mxu_dtype=jnp.float32))
        ref = reference_forward(x, latent, params, NUM_LAYERS, ACT, mxu_dtype=jnp.float32)
        assert out.shape == (B, 3, N), out.shape
        assert jnp.allclose(out, ref, atol=1e-4, rtol=1e-4), f"f32 mismatch at N={N}"

    # Device-default MXU dtype (bf16 on every TPU generation): looser tolerance vs a
    # matched-precision reference (reduced-precision matmul inputs, f32 stats).
    auto_dtype = _default_mxu_dtype()
    if auto_dtype != jnp.float32:
        N = 128
        kx_n, kl_n = jax.random.split(jax.random.fold_in(kx, 999))
        x = jax.random.normal(kx_n, (B, DIM_TEMPLATE, N), jnp.float32)
        latent = jax.random.normal(kl_n, (B, BOTTLENECK, 1), jnp.float32)
        out2 = jax.block_until_ready(
            mlp_core_forward(x, latent, params, NUM_LAYERS, ACT, mxu_dtype=auto_dtype))
        ref2 = reference_forward(x, latent, params, NUM_LAYERS, ACT, mxu_dtype=auto_dtype)
        assert jnp.allclose(out2, ref2, atol=2e-2, rtol=2e-2), "bf16 mismatch vs reference"

    print("KERNEL_OK")
</pallas_src>

<mosaic_0001>
module attributes {stable_mosaic.version = 11 : i64} {
  func.func @kernel(%arg0: memref<2x3x128xf32, #tpu.memory_space<vmem>>, %arg1: memref<2x32x1xf32, #tpu.memory_space<vmem>>, %arg2: memref<32x3xf32, #tpu.memory_space<vmem>>, %arg3: memref<32x32xf32, #tpu.memory_space<vmem>>, %arg4: memref<2x32x32xf32, #tpu.memory_space<vmem>>, %arg5: memref<3x32xf32, #tpu.memory_space<vmem>>, %arg6: memref<2x32xf32, #tpu.memory_space<vmem>>, %arg7: memref<3x2x32xf32, #tpu.memory_space<vmem>>, %arg8: memref<3x1xf32, #tpu.memory_space<vmem>>, %arg9: memref<2x3x128xf32, #tpu.memory_space<vmem>>) attributes {dimension_semantics = [], scalar_prefetch = 0 : i64, scratch_operands = 0 : i64, tpu.core_type = #tpu.core_type<tc>} {
    %c0 = arith.constant 0 : index
    %c0_0 = arith.constant 0 : index
    %0 = vector.load %arg2[%c0, %c0_0] : memref<32x3xf32, #tpu.memory_space<vmem>>, vector<32x3xf32>
    %c0_1 = arith.constant 0 : index
    %c0_2 = arith.constant 0 : index
    %c0_3 = arith.constant 0 : index
    %1 = vector.load %arg0[%c0_1, %c0_2, %c0_3] : memref<2x3x128xf32, #tpu.memory_space<vmem>>, vector<1x3x128xf32>
    %2 = vector.shape_cast %1 : vector<1x3x128xf32> to vector<3x128xf32>
    %cst = arith.constant dense<0.000000e+00> : vector<32x128xf32>
    %3 = tpu.matmul %0, %2, %cst {dimension_numbers = #tpu.dot_dimension_numbers<[1], [0], [0], [1], [0, 0, 1, 1], [], []>} : vector<32x3xf32>, vector<3x128xf32>, vector<32x128xf32> -> vector<32x128xf32>
    %c0_4 = arith.constant 0 : index
    %c0_5 = arith.constant 0 : index
    %c0_6 = arith.constant 0 : index
    %4 = vector.load %arg1[%c0_4, %c0_5, %c0_6] : memref<2x32x1xf32, #tpu.memory_space<vmem>>, vector<1x32x1xf32>
    %5 = vector.shape_cast %4 : vector<1x32x1xf32> to vector<32x1xf32>
    %6 = vector.broadcast %5 : vector<32x1xf32> to vector<32x128xf32>
    %7 = arith.addf %3, %6 : vector<32x128xf32>
    %c1 = arith.constant 1 : index
    %c0_7 = arith.constant 0 : index
    %c0_8 = arith.constant 0 : index
    %8 = vector.load %arg0[%c1, %c0_7, %c0_8] : memref<2x3x128xf32, #tpu.memory_space<vmem>>, vector<1x3x128xf32>
    %9 = vector.shape_cast %8 : vector<1x3x128xf32> to vector<3x128xf32>
    %cst_9 = arith.constant dense<0.000000e+00> : vector<32x128xf32>
    %10 = tpu.matmul %0, %9, %cst_9 {dimension_numbers = #tpu.dot_dimension_numbers<[1], [0], [0], [1], [0, 0, 1, 1], [], []>} : vector<32x3xf32>, vector<3x128xf32>, vector<32x128xf32> -> vector<32x128xf32>
    %c1_10 = arith.constant 1 : index
    %c0_11 = arith.constant 0 : index
    %c0_12 = arith.constant 0 : index
    %11 = vector.load %arg1[%c1_10, %c0_11, %c0_12] : memref<2x32x1xf32, #tpu.memory_space<vmem>>, vector<1x32x1xf32>
    %12 = vector.shape_cast %11 : vector<1x32x1xf32> to vector<32x1xf32>
    %13 = vector.broadcast %12 : vector<32x1xf32> to vector<32x128xf32>
    %14 = arith.addf %10, %13 : vector<32x128xf32>
    %15 = tpu.concatenate %7, %14 in 1 : vector<32x128xf32>, vector<32x128xf32> -> vector<32x256xf32>
    %c0_13 = arith.constant 0 : index
    %c0_14 = arith.constant 0 : index
    %16 = vector.load %arg6[%c0_13, %c0_14] : memref<2x32xf32, #tpu.memory_space<vmem>>, vector<2x32xf32>
    %cst_15 = arith.constant dense<0.000000e+00> : vector<32xf32>
    %17 = vector.multi_reduction <add>, %15, %cst_15 [1] : vector<32x256xf32> to vector<32xf32>
    %18 = vector.shape_cast %17 : vector<32xf32> to vector<32x1xf32>
    %19 = arith.mulf %15, %15 : vector<32x256xf32>
    %cst_16 = arith.constant dense<0.000000e+00> : vector<32xf32>
    %20 = vector.multi_reduction <add>, %19, %cst_16 [1] : vector<32x256xf32> to vector<32xf32>
    %21 = vector.shape_cast %20 : vector<32xf32> to vector<32x1xf32>
    %cst_17 = arith.constant 3.906250e-03 : f32
    %22 = vector.broadcast %cst_17 : f32 to vector<32x1xf32>
    %23 = arith.mulf %18, %22 : vector<32x1xf32>
    %cst_18 = arith.constant 3.906250e-03 : f32
    %24 = vector.broadcast %cst_18 : f32 to vector<32x1xf32>
    %25 = arith.mulf %21, %24 : vector<32x1xf32>
    %26 = arith.mulf %23, %23 : vector<32x1xf32>
    %27 = arith.subf %25, %26 : vector<32x1xf32>
    %cst_19 = arith.constant 0.000000e+00 : f32
    %28 = vector.broadcast %cst_19 : f32 to vector<32x1xf32>
    %29 = arith.maximumf %27, %28 : vector<32x1xf32>
    %30 = vector.extract_strided_slice %16 {offsets = [0, 0], sizes = [1, 32], strides = [1, 1]} : vector<2x32xf32> to vector<1x32xf32>
    %31 = vector.shape_cast %30 : vector<1x32xf32> to vector<32xf32>
    %32 = vector.shape_cast %31 : vector<32xf32> to vector<32x1xf32>
    %cst_20 = arith.constant 9.99999974E-6 : f32
    %33 = vector.broadcast %cst_20 : f32 to vector<32x1xf32>
    %34 = arith.addf %29, %33 : vector<32x1xf32>
    %35 = math.rsqrt %34 : vector<32x1xf32>
    %36 = arith.mulf %32, %35 : vector<32x1xf32>
    %37 = vector.extract_strided_slice %16 {offsets = [1, 0], sizes = [1, 32], strides = [1, 1]} : vector<2x32xf32> to vector<1x32xf32>
    %38 = vector.shape_cast %37 : vector<1x32xf32> to vector<32xf32>
    %39 = vector.shape_cast %38 : vector<32xf32> to vector<32x1xf32>
    %40 = arith.mulf %23, %36 : vector<32x1xf32>
    %41 = arith.subf %39, %40 : vector<32x1xf32>
    %42 = vector.broadcast %36 : vector<32x1xf32> to vector<32x256xf32>
    %43 = arith.mulf %15, %42 : vector<32x256xf32>
    %44 = vector.broadcast %41 : vector<32x1xf32> to vector<32x256xf32>
    %45 = arith.addf %43, %44 : vector<32x256xf32>
    %cst_21 = arith.constant 0.000000e+00 : f32
    %46 = vector.broadcast %cst_21 : f32 to vector<32x256xf32>
    %47 = arith.maximumf %45, %46 : vector<32x256xf32>
    %c0_22 = arith.constant 0 : index
    %c0_23 = arith.constant 0 : index
    %48 = vector.load %arg3[%c0_22, %c0_23] : memref<32x32xf32, #tpu.memory_space<vmem>>, vector<32x32xf32>
    %cst_24 = arith.constant dense<0.000000e+00> : vector<32x256xf32>
    %49 = tpu.matmul %48, %47, %cst_24 {dimension_numbers = #tpu.dot_dimension_numbers<[1], [0], [0], [1], [0, 0, 1, 1], [], []>} : vector<32x32xf32>, vector<32x256xf32>, vector<32x256xf32> -> vector<32x256xf32>
    %c0_25 = arith.constant 0 : index
    %c0_26 = arith.constant 0 : index
    %c0_27 = arith.constant 0 : index
    %50 = vector.load %arg7[%c0_25, %c0_26, %c0_27] : memref<3x2x32xf32, #tpu.memory_space<vmem>>, vector<1x2x32xf32>
    %51 = vector.shape_cast %50 : vector<1x2x32xf32> to vector<2x32xf32>
    %cst_28 = arith.constant dense<0.000000e+00> : vector<32xf32>
    %52 = vector.multi_reduction <add>, %49, %cst_28 [1] : vector<32x256xf32> to vector<32xf32>
    %53 = vector.shape_cast %52 : vector<32xf32> to vector<32x1xf32>
    %54 = arith.mulf %49, %49 : vector<32x256xf32>
    %cst_29 = arith.constant dense<0.000000e+00> : vector<32xf32>
    %55 = vector.multi_reduction <add>, %54, %cst_29 [1] : vector<32x256xf32> to vector<32xf32>
    %56 = vector.shape_cast %55 : vector<32xf32> to vector<32x1xf32>
    %cst_30 = arith.constant 3.906250e-03 : f32
    %57 = vector.broadcast %cst_30 : f32 to vector<32x1xf32>
    %58 = arith.mulf %53, %57 : vector<32x1xf32>
    %cst_31 = arith.constant 3.906250e-03 : f32
    %59 = vector.broadcast %cst_31 : f32 to vector<32x1xf32>
    %60 = arith.mulf %56, %59 : vector<32x1xf32>
    %61 = arith.mulf %58, %58 : vector<32x1xf32>
    %62 = arith.subf %60, %61 : vector<32x1xf32>
    %cst_32 = arith.constant 0.000000e+00 : f32
    %63 = vector.broadcast %cst_32 : f32 to vector<32x1xf32>
    %64 = arith.maximumf %62, %63 : vector<32x1xf32>
    %65 = vector.extract_strided_slice %51 {offsets = [0, 0], sizes = [1, 32], strides = [1, 1]} : vector<2x32xf32> to vector<1x32xf32>
    %66 = vector.shape_cast %65 : vector<1x32xf32> to vector<32xf32>
    %67 = vector.shape_cast %66 : vector<32xf32> to vector<32x1xf32>
    %cst_33 = arith.constant 9.99999974E-6 : f32
    %68 = vector.broadcast %cst_33 : f32 to vector<32x1xf32>
    %69 = arith.addf %64, %68 : vector<32x1xf32>
    %70 = math.rsqrt %69 : vector<32x1xf32>
    %71 = arith.mulf %67, %70 : vector<32x1xf32>
    %72 = vector.extract_strided_slice %51 {offsets = [1, 0], sizes = [1, 32], strides = [1, 1]} : vector<2x32xf32> to vector<1x32xf32>
    %73 = vector.shape_cast %72 : vector<1x32xf32> to vector<32xf32>
    %74 = vector.shape_cast %73 : vector<32xf32> to vector<32x1xf32>
    %75 = arith.mulf %58, %71 : vector<32x1xf32>
    %76 = arith.subf %74, %75 : vector<32x1xf32>
    %77 = vector.broadcast %71 : vector<32x1xf32> to vector<32x256xf32>
    %78 = arith.mulf %49, %77 : vector<32x256xf32>
    %79 = vector.broadcast %76 : vector<32x1xf32> to vector<32x256xf32>
    %80 = arith.addf %78, %79 : vector<32x256xf32>
    %cst_34 = arith.constant 0.000000e+00 : f32
    %81 = vector.broadcast %cst_34 : f32 to vector<32x256xf32>
    %82 = arith.maximumf %80, %81 : vector<32x256xf32>
    %c0_35 = arith.constant 0 : index
    %c0_36 = arith.constant 0 : index
    %c0_37 = arith.constant 0 : index
    %83 = vector.load %arg4[%c0_35, %c0_36, %c0_37] : memref<2x32x32xf32, #tpu.memory_space<vmem>>, vector<1x32x32xf32>
    %84 = vector.shape_cast %83 : vector<1x32x32xf32> to vector<32x32xf32>
    %cst_38 = arith.constant dense<0.000000e+00> : vector<32x256xf32>
    %85 = tpu.matmul %84, %82, %cst_38 {dimension_numbers = #tpu.dot_dimension_numbers<[1], [0], [0], [1], [0, 0, 1, 1], [], []>} : vector<32x32xf32>, vector<32x256xf32>, vector<32x256xf32> -> vector<32x256xf32>
    %c1_39 = arith.constant 1 : index
    %c0_40 = arith.constant 0 : index
    %c0_41 = arith.constant 0 : index
    %86 = vector.load %arg7[%c1_39, %c0_40, %c0_41] : memref<3x2x32xf32, #tpu.memory_space<vmem>>, vector<1x2x32xf32>
    %87 = vector.shape_cast %86 : vector<1x2x32xf32> to vector<2x32xf32>
    %cst_42 = arith.constant dense<0.000000e+00> : vector<32xf32>
    %88 = vector.multi_reduction <add>, %85, %cst_42 [1] : vector<32x256xf32> to vector<32xf32>
    %89 = vector.shape_cast %88 : vector<32xf32> to vector<32x1xf32>
    %90 = arith.mulf %85, %85 : vector<32x256xf32>
    %cst_43 = arith.constant dense<0.000000e+00> : vector<32xf32>
    %91 = vector.multi_reduction <add>, %90, %cst_43 [1] : vector<32x256xf32> to vector<32xf32>
    %92 = vector.shape_cast %91 : vector<32xf32> to vector<32x1xf32>
    %cst_44 = arith.constant 3.906250e-03 : f32
    %93 = vector.broadcast %cst_44 : f32 to vector<32x1xf32>
    %94 = arith.mulf %89, %93 : vector<32x1xf32>
    %cst_45 = arith.constant 3.906250e-03 : f32
    %95 = vector.broadcast %cst_45 : f32 to vector<32x1xf32>
    %96 = arith.mulf %92, %95 : vector<32x1xf32>
    %97 = arith.mulf %94, %94 : vector<32x1xf32>
    %98 = arith.subf %96, %97 : vector<32x1xf32>
    %cst_46 = arith.constant 0.000000e+00 : f32
    %99 = vector.broadcast %cst_46 : f32 to vector<32x1xf32>
    %100 = arith.maximumf %98, %99 : vector<32x1xf32>
    %101 = vector.extract_strided_slice %87 {offsets = [0, 0], sizes = [1, 32], strides = [1, 1]} : vector<2x32xf32> to vector<1x32xf32>
    %102 = vector.shape_cast %101 : vector<1x32xf32> to vector<32xf32>
    %103 = vector.shape_cast %102 : vector<32xf32> to vector<32x1xf32>
    %cst_47 = arith.constant 9.99999974E-6 : f32
    %104 = vector.broadcast %cst_47 : f32 to vector<32x1xf32>
    %105 = arith.addf %100, %104 : vector<32x1xf32>
    %106 = math.rsqrt %105 : vector<32x1xf32>
    %107 = arith.mulf %103, %106 : vector<32x1xf32>
    %108 = vector.extract_strided_slice %87 {offsets = [1, 0], sizes = [1, 32], strides = [1, 1]} : vector<2x32xf32> to vector<1x32xf32>
    %109 = vector.shape_cast %108 : vector<1x32xf32> to vector<32xf32>
    %110 = vector.shape_cast %109 : vector<32xf32> to vector<32x1xf32>
    %111 = arith.mulf %94, %107 : vector<32x1xf32>
    %112 = arith.subf %110, %111 : vector<32x1xf32>
    %113 = vector.broadcast %107 : vector<32x1xf32> to vector<32x256xf32>
    %114 = arith.mulf %85, %113 : vector<32x256xf32>
    %115 = vector.broadcast %112 : vector<32x1xf32> to vector<32x256xf32>
    %116 = arith.addf %114, %115 : vector<32x256xf32>
    %cst_48 = arith.constant 0.000000e+00 : f32
    %117 = vector.broadcast %cst_48 : f32 to vector<32x256xf32>
    %118 = arith.maximumf %116, %117 : vector<32x256xf32>
    %c1_49 = arith.constant 1 : index
    %c0_50 = arith.constant 0 : index
    %c0_51 = arith.constant 0 : index
    %119 = vector.load %arg4[%c1_49, %c0_50, %c0_51] : memref<2x32x32xf32, #tpu.memory_space<vmem>>, vector<1x32x32xf32>
    %120 = vector.shape_cast %119 : vector<1x32x32xf32> to vector<32x32xf32>
    %cst_52 = arith.constant dense<0.000000e+00> : vector<32x256xf32>
    %121 = tpu.matmul %120, %118, %cst_52 {dimension_numbers = #tpu.dot_dimension_numbers<[1], [0], [0], [1], [0, 0, 1, 1], [], []>} : vector<32x32xf32>, vector<32x256xf32>, vector<32x256xf32> -> vector<32x256xf32>
    %c2 = arith.constant 2 : index
    %c0_53 = arith.constant 0 : index
    %c0_54 = arith.constant 0 : index
    %122 = vector.load %arg7[%c2, %c0_53, %c0_54] : memref<3x2x32xf32, #tpu.memory_space<vmem>>, vector<1x2x32xf32>
    %123 = vector.shape_cast %122 : vector<1x2x32xf32> to vector<2x32xf32>
    %cst_55 = arith.constant dense<0.000000e+00> : vector<32xf32>
    %124 = vector.multi_reduction <add>, %121, %cst_55 [1] : vector<32x256xf32> to vector<32xf32>
    %125 = vector.shape_cast %124 : vector<32xf32> to vector<32x1xf32>
    %126 = arith.mulf %121, %121 : vector<32x256xf32>
    %cst_56 = arith.constant dense<0.000000e+00> : vector<32xf32>
    %127 = vector.multi_reduction <add>, %126, %cst_56 [1] : vector<32x256xf32> to vector<32xf32>
    %128 = vector.shape_cast %127 : vector<32xf32> to vector<32x1xf32>
    %cst_57 = arith.constant 3.906250e-03 : f32
    %129 = vector.broadcast %cst_57 : f32 to vector<32x1xf32>
    %130 = arith.mulf %125, %129 : vector<32x1xf32>
    %cst_58 = arith.constant 3.906250e-03 : f32
    %131 = vector.broadcast %cst_58 : f32 to vector<32x1xf32>
    %132 = arith.mulf %128, %131 : vector<32x1xf32>
    %133 = arith.mulf %130, %130 : vector<32x1xf32>
    %134 = arith.subf %132, %133 : vector<32x1xf32>
    %cst_59 = arith.constant 0.000000e+00 : f32
    %135 = vector.broadcast %cst_59 : f32 to vector<32x1xf32>
    %136 = arith.maximumf %134, %135 : vector<32x1xf32>
    %137 = vector.extract_strided_slice %123 {offsets = [0, 0], sizes = [1, 32], strides = [1, 1]} : vector<2x32xf32> to vector<1x32xf32>
    %138 = vector.shape_cast %137 : vector<1x32xf32> to vector<32xf32>
    %139 = vector.shape_cast %138 : vector<32xf32> to vector<32x1xf32>
    %cst_60 = arith.constant 9.99999974E-6 : f32
    %140 = vector.broadcast %cst_60 : f32 to vector<32x1xf32>
    %141 = arith.addf %136, %140 : vector<32x1xf32>
    %142 = math.rsqrt %141 : vector<32x1xf32>
    %143 = arith.mulf %139, %142 : vector<32x1xf32>
    %144 = vector.extract_strided_slice %123 {offsets = [1, 0], sizes = [1, 32], strides = [1, 1]} : vector<2x32xf32> to vector<1x32xf32>
    %145 = vector.shape_cast %144 : vector<1x32xf32> to vector<32xf32>
    %146 = vector.shape_cast %145 : vector<32xf32> to vector<32x1xf32>
    %147 = arith.mulf %130, %143 : vector<32x1xf32>
    %148 = arith.subf %146, %147 : vector<32x1xf32>
    %149 = vector.broadcast %143 : vector<32x1xf32> to vector<32x256xf32>
    %150 = arith.mulf %121, %149 : vector<32x256xf32>
    %151 = vector.broadcast %148 : vector<32x1xf32> to vector<32x256xf32>
    %152 = arith.addf %150, %151 : vector<32x256xf32>
    %cst_61 = arith.constant 0.000000e+00 : f32
    %153 = vector.broadcast %cst_61 : f32 to vector<32x256xf32>
    %154 = arith.maximumf %152, %153 : vector<32x256xf32>
    %c0_62 = arith.constant 0 : index
    %c0_63 = arith.constant 0 : index
    %155 = vector.load %arg5[%c0_62, %c0_63] : memref<3x32xf32, #tpu.memory_space<vmem>>, vector<3x32xf32>
    %cst_64 = arith.constant dense<0.000000e+00> : vector<3x256xf32>
    %156 = tpu.matmul %155, %154, %cst_64 {dimension_numbers = #tpu.dot_dimension_numbers<[1], [0], [0], [1], [0, 0, 1, 1], [], []>} : vector<3x32xf32>, vector<32x256xf32>, vector<3x256xf32> -> vector<3x256xf32>
    %c0_65 = arith.constant 0 : index
    %c0_66 = arith.constant 0 : index
    %157 = vector.load %arg8[%c0_65, %c0_66] : memref<3x1xf32, #tpu.memory_space<vmem>>, vector<3x1xf32>
    %158 = vector.broadcast %157 : vector<3x1xf32> to vector<3x256xf32>
    %159 = arith.addf %156, %158 : vector<3x256xf32>
    %160 = vector.extract_strided_slice %159 {offsets = [0, 0], sizes = [3, 128], strides = [1, 1]} : vector<3x256xf32> to vector<3x128xf32>
    %c0_67 = arith.constant 0 : index
    %c0_68 = arith.constant 0 : index
    %c0_69 = arith.constant 0 : index
    %161 = vector.load %arg9[%c0_67, %c0_68, %c0_69] : memref<2x3x128xf32, #tpu.memory_space<vmem>>, vector<1x3x128xf32>
    %162 = vector.shape_cast %161 : vector<1x3x128xf32> to vector<3x128xf32>
    %163 = vector.shape_cast %160 : vector<3x128xf32> to vector<1x3x128xf32>
    tpu.vector_store %arg9[%c0_67, %c0_68, %c0_69], %163 {strides = array<i32>} : memref<2x3x128xf32, #tpu.memory_space<vmem>>, vector<1x3x128xf32>,
    %164 = vector.extract_strided_slice %159 {offsets = [0, 128], sizes = [3, 128], strides = [1, 1]} : vector<3x256xf32> to vector<3x128xf32>
    %c1_70 = arith.constant 1 : index
    %c0_71 = arith.constant 0 : index
    %c0_72 = arith.constant 0 : index
    %165 = vector.load %arg9[%c1_70, %c0_71, %c0_72] : memref<2x3x128xf32, #tpu.memory_space<vmem>>, vector<1x3x128xf32>
    %166 = vector.shape_cast %165 : vector<1x3x128xf32> to vector<3x128xf32>
    %167 = vector.shape_cast %164 : vector<3x128xf32> to vector<1x3x128xf32>
    tpu.vector_store %arg9[%c1_70, %c0_71, %c0_72], %167 {strides = array<i32>} : memref<2x3x128xf32, #tpu.memory_space<vmem>>, vector<1x3x128xf32>,
    return
  }
}

</mosaic_0001>

<llo_original>
// kernel: tpu_custom_call.1
$region0: #{tpu_custom_call.1}
  #allocation0 [shape = 'u32[]', space=smem, size = 0x4, offset = 0x4, fixed_abs, tag = 'smem constant byte address 0x4 - core index']
  #allocation1 [shape = 'u32[144,128]{1,0:T(1,128)}', space=vmem, size = 0x12000, scoped, tag = 'internal scratch']
  %s0 = inlined_call_operand.vmem [shape: f32[2,3,128], index: 0, kind: input, shape index: {}]
  %s1 = inlined_call_operand.vmem [shape: f32[2,32,1], index: 1, kind: input, shape index: {}]
  %s2 = inlined_call_operand.vmem [shape: f32[32,3], index: 2, kind: input, shape index: {}]
  %s3 = inlined_call_operand.vmem [shape: f32[32,32], index: 3, kind: input, shape index: {}]
  %s4 = inlined_call_operand.vmem [shape: f32[2,32,32], index: 4, kind: input, shape index: {}]
  %s5 = inlined_call_operand.vmem [shape: f32[3,32], index: 5, kind: input, shape index: {}]
  %s6 = inlined_call_operand.vmem [shape: f32[2,32], index: 6, kind: input, shape index: {}]
  %s7 = inlined_call_operand.vmem [shape: f32[3,2,32], index: 7, kind: input, shape index: {}]
  %s8 = inlined_call_operand.vmem [shape: f32[3,1], index: 8, kind: input, shape index: {}]
  %s9 = inlined_call_operand.vmem [shape: f32[2,3,128], index: 9, kind: output, shape index: {}]
  %s10 = sld [smem:[#allocation0]]
  $region46: #{tpu_custom_call.1} parent=0
    _
  %s12 = ssub.s32 1, %s10
  %s13 = scalar_select 0, %s12, %s10
  // Predicated region
  $region2: #{tpu_custom_call.1} parent=0 // pred_check
    _
  $region3: #{tpu_custom_call.1} parent=0 // pred_check_branch
    %15 = sbr.rel (0) target = $region5
  $region4: #{tpu_custom_call.1} parent=0 // pred_region
    _
  $region5: #{tpu_custom_call.1} parent=0 // pred_fallthru
    _
  // Predicated region
  $region6: #{tpu_custom_call.1} parent=0 // pred_check
    _
  $region7: #{tpu_custom_call.1} parent=0 // pred_check_branch
    %17 = sbr.rel (0) target = $region9
  $region8: #{tpu_custom_call.1} parent=0 // pred_region
    _
  $region9: #{tpu_custom_call.1} parent=0 // pred_fallthru
    _
  // Predicated region
  $region10: #{tpu_custom_call.1} parent=0 // pred_check
    _
  $region11: #{tpu_custom_call.1} parent=0 // pred_check_branch
    %19 = sbr.rel (0) target = $region13
  $region12: #{tpu_custom_call.1} parent=0 // pred_region
    _
  $region13: #{tpu_custom_call.1} parent=0 // pred_fallthru
    _
  // Predicated region
  $region14: #{tpu_custom_call.1} parent=0 // pred_check
    _
  $region15: #{tpu_custom_call.1} parent=0 // pred_check_branch
    %21 = sbr.rel (0) target = $region17
  $region16: #{tpu_custom_call.1} parent=0 // pred_region
    _
  $region17: #{tpu_custom_call.1} parent=0 // pred_fallthru
    _
  // Predicated region
  $region18: #{tpu_custom_call.1} parent=0 // pred_check
    _
  $region19: #{tpu_custom_call.1} parent=0 // pred_check_branch
    %23 = sbr.rel (0) target = $region21
  $region20: #{tpu_custom_call.1} parent=0 // pred_region
    _
  $region21: #{tpu_custom_call.1} parent=0 // pred_fallthru
    _
  // Predicated region
  $region22: #{tpu_custom_call.1} parent=0 // pred_check
    _
  $region23: #{tpu_custom_call.1} parent=0 // pred_check_branch
    %25 = sbr.rel (0) target = $region25
  $region24: #{tpu_custom_call.1} parent=0 // pred_region
    _
  $region25: #{tpu_custom_call.1} parent=0 // pred_fallthru
    _
  // Predicated region
  $region26: #{tpu_custom_call.1} parent=0 // pred_check
    _
  $region27: #{tpu_custom_call.1} parent=0 // pred_check_branch
    %27 = sbr.rel (0) target = $region29
  $region28: #{tpu_custom_call.1} parent=0 // pred_region
    _
  $region29: #{tpu_custom_call.1} parent=0 // pred_fallthru
    _
  // Predicated region
  $region30: #{tpu_custom_call.1} parent=0 // pred_check
    _
  $region31: #{tpu_custom_call.1} parent=0 // pred_check_branch
    %29 = sbr.rel (0) target = $region33
  $region32: #{tpu_custom_call.1} parent=0 // pred_region
    _
  $region33: #{tpu_custom_call.1} parent=0 // pred_fallthru
    _
  // Predicated region
  $region34: #{tpu_custom_call.1} parent=0 // pred_check
    _
  $region35: #{tpu_custom_call.1} parent=0 // pred_check_branch
    %31 = sbr.rel (0) target = $region37
  $region36: #{tpu_custom_call.1} parent=0 // pred_region
    _
  $region37: #{tpu_custom_call.1} parent=0 // pred_fallthru
    _
  %v32 = vld [vmem:[%s2] sm:$0xff]
  %v33 = vld [vmem:[%s2 + $0x8] sm:$0xff]
  %v34 = vld [vmem:[%s2 + $0x10] sm:$0xff]
  %v35 = vld [vmem:[%s2 + $0x18] sm:$0xff]
  %v36 = vld [vmem:[%s0] sm:$0x7]
  %v37 = vld [vmem:[%s1] sm:$0xff]
  %v38 = vld [vmem:[%s1 + $0x8] sm:$0xff]
  %v39 = vld [vmem:[%s1 + $0x10] sm:$0xff]
  %v40 = vld [vmem:[%s1 + $0x18] sm:$0xff]
  %42 = vset.pattern.permute.xlu0 0
  %43 = vperm.xlu0 %42, %v37
  %v44 = vpop.permute.xlu0 %43
  %47 = vset.pattern.permute.xlu0 0
  %48 = vperm.xlu0 %47, %v38
  %v49 = vpop.permute.xlu0 %48
  %52 = vset.pattern.permute.xlu0 0
  %53 = vperm.xlu0 %52, %v39
  %v54 = vpop.permute.xlu0 %53
  %57 = vset.pattern.permute.xlu0 0
  %58 = vperm.xlu0 %57, %v40
  %v59 = vpop.permute.xlu0 %58
  %vm61 = vcmask 23552
  %v63 = vsel %vm61, %v32, 0
  %v66 = vsel %vm61, %v33, 0
  %v69 = vsel %vm61, %v34, 0
  %v72 = vsel %vm61, %v35, 0
  %vm74 = vcmask 1042432
  %v76 = vsel %vm74, %v36, 0
  %78 = vmatprep.subr.mxu0 0.0
  %79 = vmatpush1.msra.mxu0 %v76
  %80 = vmatprep.subr.mxu0 0.0
  %81 = vmatpush1.msra.mxu0 0.0
  %82 = vmatprep.subr.mxu0 0.0
  %83 = vmatpush1.msra.mxu0 0.0
  %84 = vmatprep.subr.mxu0 0.0
  %85 = vmatpush1.msra.mxu0 0.0
  %86 = vmatprep.subr.mxu0 0.0
  %87 = vmatpush1.msra.mxu0 0.0
  %88 = vmatprep.subr.mxu0 0.0
  %89 = vmatpush1.msra.mxu0 0.0
  %90 = vmatprep.subr.mxu0 0.0
  %91 = vmatpush1.msra.mxu0 0.0
  %92 = vmatprep.subr.mxu0 0.0
  %93 = vmatpush1.msra.mxu0 0.0
  %94 = vmatprep.subr.mxu0 0.0
  %95 = vmatpush1.msra.mxu0 0.0
  %96 = vmatprep.subr.mxu0 0.0
  %97 = vmatpush1.msra.mxu0 0.0
  %98 = vmatprep.subr.mxu0 0.0
  %99 = vmatpush1.msra.mxu0 0.0
  %100 = vmatprep.subr.mxu0 0.0
  %101 = vmatpush1.msra.mxu0 0.0
  %102 = vmatprep.subr.mxu0 0.0
  %103 = vmatpush1.msra.mxu0 0.0
  %104 = vmatprep.subr.mxu0 0.0
  %105 = vmatpush1.msra.mxu0 0.0
  %106 = vmatprep.subr.mxu0 0.0
  %107 = vmatpush1.msra.mxu0 0.0
  %108 = vmatprep.subr.mxu0 0.0
  %109 = vmatpush1.msra.mxu0 0.0
  %110 = vmatprep.subr.mxu0 0.0
  %111 = vmatpush1.msra.mxu0 0.0
  %112 = vmatprep.subr.mxu0 0.0
  %113 = vmatpush1.msra.mxu0 0.0
  %114 = vmatprep.subr.mxu0 0.0
  %115 = vmatpush1.msra.mxu0 0.0
  %116 = vmatprep.subr.mxu0 0.0
  %117 = vmatpush1.msra.mxu0 0.0
  %118 = vmatprep.subr.mxu0 0.0
  %119 = vmatpush1.msra.mxu0 0.0
  %120 = vmatprep.subr.mxu0 0.0
  %121 = vmatpush1.msra.mxu0 0.0
  %122 = vmatprep.subr.mxu0 0.0
  %123 = vmatpush1.msra.mxu0 0.0
  %124 = vmatprep.subr.mxu0 0.0
  %125 = vmatpush1.msra.mxu0 0.0
  %126 = vmatprep.subr.mxu0 0.0
  %127 = vmatpush1.msra.mxu0 0.0
  %128 = vmatprep.subr.mxu0 0.0
  %129 = vmatpush1.msra.mxu0 0.0
  %130 = vmatprep.subr.mxu0 0.0
  %131 = vmatpush1.msra.mxu0 0.0
  %132 = vmatprep.subr.mxu0 0.0
  %133 = vmatpush1.msra.mxu0 0.0
  %134 = vmatprep.subr.mxu0 0.0
  %135 = vmatpush1.msra.mxu0 0.0
  %136 = vmatprep.subr.mxu0 0.0
  %137 = vmatpush1.msra.mxu0 0.0
  %138 = vmatprep.subr.mxu0 0.0
  %139 = vmatpush1.msra.mxu0 0.0
  %140 = vmatprep.subr.mxu0 0.0
  %141 = vmatpush1.msra.mxu0 0.0
  %142 = vmatprep.mubr.f32.mxu0 0.0
  %143 = vmatmul.mubr.f32.gmra.mrb[0].mxu0 %v63
  %v144 = vpop.f32.mrb[0].mxu0
  %v145 = vadd.f32 %v44, %v144
  %v146 = vpop.f32.mrb[0].mxu0
  %147 = vmatprep.mubr.f32.mxu0 0.0
  %148 = vmatmul.mubr.f32.gmra.mrb[0].mxu0 %v66
  %v149 = vpop.f32.mrb[0].mxu0
  %v150 = vadd.f32 %v49, %v149
  %v151 = vpop.f32.mrb[0].mxu0
  %152 = vmatprep.mubr.f32.mxu0 0.0
  %153 = vmatmul.mubr.f32.gmra.mrb[0].mxu0 %v69
  %v154 = vpop.f32.mrb[0].mxu0
  %v155 = vadd.f32 %v54, %v154
  %v156 = vpop.f32.mrb[0].mxu0
  %157 = vmatprep.mubr.f32.mxu0 0.0
  %158 = vmatmul.mubr.f32.gmra.mrb[0].mxu0 %v72
  %v159 = vpop.f32.mrb[0].mxu0
  %v160 = vadd.f32 %v59, %v159
  %v161 = vpop.f32.mrb[0].mxu0
  %162 = vdwg.mxu0
  %s163 = scalar_lea.vmem %s0, 4
  %v164 = vld [vmem:[%s163] sm:$0x7]
  %s165 = scalar_lea.vmem %s1, 32
  %v166 = vld [vmem:[%s165] sm:$0xff]
  %v167 = vld [vmem:[%s165 + $0x8] sm:$0xff]
  %v168 = vld [vmem:[%s165 + $0x10] sm:$0xff]
  %v169 = vld [vmem:[%s165 + $0x18] sm:$0xff]
  %171 = vset.pattern.permute.xlu0 0
  %172 = vperm.xlu0 %171, %v166
  %v173 = vpop.permute.xlu0 %172
  %176 = vset.pattern.permute.xlu0 0
  %177 = vperm.xlu0 %176, %v167
  %v178 = vpop.permute.xlu0 %177
  %181 = vset.pattern.permute.xlu0 0
  %182 = vperm.xlu0 %181, %v168
  %v183 = vpop.permute.xlu0 %182
  %186 = vset.pattern.permute.xlu0 0
  %187 = vperm.xlu0 %186, %v169
  %v188 = vpop.permute.xlu0 %187
  %v191 = vsel %vm74, %v164, 0
  %193 = vmatprep.subr.mxu0 0.0
  %194 = vmatpush1.msra.mxu0 %v191
  %195 = vmatprep.subr.mxu0 0.0
  %196 = vmatpush1.msra.mxu0 0.0
  %197 = vmatprep.subr.mxu0 0.0
  %198 = vmatpush1.msra.mxu0 0.0
  %199 = vmatprep.subr.mxu0 0.0
  %200 = vmatpush1.msra.mxu0 0.0
  %201 = vmatprep.subr.mxu0 0.0
  %202 = vmatpush1.msra.mxu0 0.0
  %203 = vmatprep.subr.mxu0 0.0
  %204 = vmatpush1.msra.mxu0 0.0
  %205 = vmatprep.subr.mxu0 0.0
  %206 = vmatpush1.msra.mxu0 0.0
  %207 = vmatprep.subr.mxu0 0.0
  %208 = vmatpush1.msra.mxu0 0.0
  %209 = vmatprep.subr.mxu0 0.0
  %210 = vmatpush1.msra.mxu0 0.0
  %211 = vmatprep.subr.mxu0 0.0
  %212 = vmatpush1.msra.mxu0 0.0
  %213 = vmatprep.subr.mxu0 0.0
  %214 = vmatpush1.msra.mxu0 0.0
  %215 = vmatprep.subr.mxu0 0.0
  %216 = vmatpush1.msra.mxu0 0.0
  %217 = vmatprep.subr.mxu0 0.0
  %218 = vmatpush1.msra.mxu0 0.0
  %219 = vmatprep.subr.mxu0 0.0
  %220 = vmatpush1.msra.mxu0 0.0
  %221 = vmatprep.subr.mxu0 0.0
  %222 = vmatpush1.msra.mxu0 0.0
  %223 = vmatprep.subr.mxu0 0.0
  %224 = vmatpush1.msra.mxu0 0.0
  %225 = vmatprep.subr.mxu0 0.0
  %226 = vmatpush1.msra.mxu0 0.0
  %227 = vmatprep.subr.mxu0 0.0
  %228 = vmatpush1.msra.mxu0 0.0
  %229 = vmatprep.subr.mxu0 0.0
  %230 = vmatpush1.msra.mxu0 0.0
  %231 = vmatprep.subr.mxu0 0.0
  %232 = vmatpush1.msra.mxu0 0.0
  %233 = vmatprep.subr.mxu0 0.0
  %234 = vmatpush1.msra.mxu0 0.0
  %235 = vmatprep.subr.mxu0 0.0
  %236 = vmatpush1.msra.mxu0 0.0
  %237 = vmatprep.subr.mxu0 0.0
  %238 = vmatpush1.msra.mxu0 0.0
  %239 = vmatprep.subr.mxu0 0.0
  %240 = vmatpush1.msra.mxu0 0.0
  %241 = vmatprep.subr.mxu0 0.0
  %242 = vmatpush1.msra.mxu0 0.0
  %243 = vmatprep.subr.mxu0 0.0
  %244 = vmatpush1.msra.mxu0 0.0
  %245 = vmatprep.subr.mxu0 0.0
  %246 = vmatpush1.msra.mxu0 0.0
  %247 = vmatprep.subr.mxu0 0.0
  %248 = vmatpush1.msra.mxu0 0.0
  %249 = vmatprep.subr.mxu0 0.0
  %250 = vmatpush1.msra.mxu0 0.0
  %251 = vmatprep.subr.mxu0 0.0
  %252 = vmatpush1.msra.mxu0 0.0
  %253 = vmatprep.subr.mxu0 0.0
  %254 = vmatpush1.msra.mxu0 0.0
  %255 = vmatprep.subr.mxu0 0.0
  %256 = vmatpush1.msra.mxu0 0.0
  %257 = vmatprep.mubr.f32.mxu0 0.0
  %258 = vmatmul.mubr.f32.gmra.mrb[0].mxu0 %v63
  %v259 = vpop.f32.mrb[0].mxu0
  %v260 = vadd.f32 %v173, %v259
  %v261 = vpop.f32.mrb[0].mxu0
  %262 = vmatprep.mubr.f32.mxu0 0.0
  %263 = vmatmul.mubr.f32.gmra.mrb[0].mxu0 %v66
  %v264 = vpop.f32.mrb[0].mxu0
  %v265 = vadd.f32 %v178, %v264
  %v266 = vpop.f32.mrb[0].mxu0
  %267 = vmatprep.mubr.f32.mxu0 0.0
  %268 = vmatmul.mubr.f32.gmra.mrb[0].mxu0 %v69
  %v269 = vpop.f32.mrb[0].mxu0
  %v270 = vadd.f32 %v183, %v269
  %v271 = vpop.f32.mrb[0].mxu0
  %272 = vmatprep.mubr.f32.mxu0 0.0
  %273 = vmatmul.mubr.f32.gmra.mrb[0].mxu0 %v72
  %v274 = vpop.f32.mrb[0].mxu0
  %v275 = vadd.f32 %v188, %v274
  %v276 = vpop.f32.mrb[0].mxu0
  %277 = vdwg.mxu0
  %v278 = vld [vmem:[%s6] sm:$0x3]
  %v279 = vadd.f32 %v145, %v260
  %280 = vadd.xlane.f32.xlu0 %v279
  %v281 = vpop.xlane.xlu0 %280
  %v282 = vadd.f32 %v150, %v265
  %283 = vadd.xlane.f32.xlu0 %v282
  %v284 = vpop.xlane.xlu0 %283
  %v285 = vadd.f32 %v155, %v270
  %286 = vadd.xlane.f32.xlu0 %v285
  %v287 = vpop.xlane.xlu0 %286
  %v288 = vadd.f32 %v160, %v275
  %289 = vadd.xlane.f32.xlu0 %v288
  %v290 = vpop.xlane.xlu0 %289
  %v291 = vmul.f32 %v145, %v145
  %v292 = vmul.f32 %v260, %v260
  %v293 = vmul.f32 %v150, %v150
  %v294 = vmul.f32 %v265, %v265
  %v295 = vmul.f32 %v155, %v155
  %v296 = vmul.f32 %v270, %v270
  %v297 = vmul.f32 %v160, %v160
  %v298 = vmul.f32 %v275, %v275
  %v299 = vadd.f32 %v291, %v292
  %300 = vadd.xlane.f32.xlu0 %v299
  %v301 = vpop.xlane.xlu0 %300
  %v302 = vadd.f32 %v293, %v294
  %303 = vadd.xlane.f32.xlu0 %v302
  %v304 = vpop.xlane.xlu0 %303
  %v305 = vadd.f32 %v295, %v296
  %306 = vadd.xlane.f32.xlu0 %v305
  %v307 = vpop.xlane.xlu0 %306
  %v308 = vadd.f32 %v297, %v298
  %309 = vadd.xlane.f32.xlu0 %v308
  %v310 = vpop.xlane.xlu0 %309
  %v311 = vmul.f32 %v281, 0.00390625
  %v312 = vmul.f32 %v284, 0.00390625
  %v313 = vmul.f32 %v287, 0.00390625
  %v314 = vmul.f32 %v290, 0.00390625
  %v315 = vmul.f32 %v301, 0.00390625
  %v316 = vmul.f32 %v304, 0.00390625
  %v317 = vmul.f32 %v307, 0.00390625
  %v318 = vmul.f32 %v310, 0.00390625
  %v319 = vmul.f32 %v311, %v311
  %v320 = vmul.f32 %v312, %v312
  %v321 = vmul.f32 %v313, %v313
  %v322 = vmul.f32 %v314, %v314
  %v323 = vsub.f32 %v315, %v319
  %v324 = vsub.f32 %v316, %v320
  %v325 = vsub.f32 %v317, %v321
  %v326 = vsub.f32 %v318, %v322
  %v327 = vmax.f32 %v323, 0.0
  %v328 = vmax.f32 %v324, 0.0
  %v329 = vmax.f32 %v325, 0.0
  %v330 = vmax.f32 %v326, 0.0
  %v331 = vlaneseq
  %v332 = vshrl.u32 %v331, 7
  %v333 = vsub.s32 0, %v332
  %v334 = vrot.slane %v278, %v333
  %336 = vbcast.lane.b32.xlu0 %v334, 256
  %v337 = vpop.permute.xlu0 %336
  %s339 = sor.u32 256, 8
  %340 = vbcast.lane.b32.xlu0 %v334, %s339
  %v341 = vpop.permute.xlu0 %340
  %s343 = sor.u32 256, 16
  %344 = vbcast.lane.b32.xlu0 %v334, %s343
  %v345 = vpop.permute.xlu0 %344
  %s347 = sor.u32 256, 24
  %348 = vbcast.lane.b32.xlu0 %v334, %s347
  %v349 = vpop.permute.xlu0 %348
  %v350 = vadd.f32 %v327, 1e-05
  %v351 = vadd.f32 %v328, 1e-05
  %v352 = vadd.f32 %v329, 1e-05
  %v353 = vadd.f32 %v330, 1e-05
  %v354 = vrsqrt.pop %v350
  %v355 = vrsqrt.pop %v351
  %v356 = vrsqrt.pop %v352
  %v357 = vrsqrt.pop %v353
  %v358 = vmul.f32 %v337, %v354
  %v359 = vmul.f32 %v341, %v355
  %v360 = vmul.f32 %v345, %v356
  %v361 = vmul.f32 %v349, %v357
  %v362 = vlaneseq
  %v363 = vshrl.u32 %v362, 7
  %v364 = vsub.s32 1, %v363
  %v365 = vrot.slane %v278, %v364
  %367 = vbcast.lane.b32.xlu0 %v365, 256
  %v368 = vpop.permute.xlu0 %367
  %s370 = sor.u32 256, 8
  %371 = vbcast.lane.b32.xlu0 %v365, %s370
  %v372 = vpop.permute.xlu0 %371
  %s374 = sor.u32 256, 16
  %375 = vbcast.lane.b32.xlu0 %v365, %s374
  %v376 = vpop.permute.xlu0 %375
  %s378 = sor.u32 256, 24
  %379 = vbcast.lane.b32.xlu0 %v365, %s378
  %v380 = vpop.permute.xlu0 %379
  %v381 = vmul.f32 %v311, %v358
  %v382 = vmul.f32 %v312, %v359
  %v383 = vmul.f32 %v313, %v360
  %v384 = vmul.f32 %v314, %v361
  %v385 = vsub.f32 %v368, %v381
  %v386 = vsub.f32 %v372, %v382
  %v387 = vsub.f32 %v376, %v383
  %v388 = vsub.f32 %v380, %v384
  %v389 = vmul.f32 %v145, %v358
  %v390 = vmul.f32 %v260, %v358
  %v391 = vmul.f32 %v150, %v359
  %v392 = vmul.f32 %v265, %v359
  %v393 = vmul.f32 %v155, %v360
  %v394 = vmul.f32 %v270, %v360
  %v395 = vmul.f32 %v160, %v361
  %v396 = vmul.f32 %v275, %v361
  %v397 = vadd.f32 %v389, %v385
  %v398 = vadd.f32 %v390, %v385
  %v399 = vadd.f32 %v391, %v386
  %v400 = vadd.f32 %v392, %v386
  %v401 = vadd.f32 %v393, %v387
  %v402 = vadd.f32 %v394, %v387
  %v403 = vadd.f32 %v395, %v388
  %v404 = vadd.f32 %v396, %v388
  %v405 = vmax.f32 %v397, 0.0
  %v406 = vmax.f32 %v398, 0.0
  %v407 = vmax.f32 %v399, 0.0
  %v408 = vmax.f32 %v400, 0.0
  %v409 = vmax.f32 %v401, 0.0
  %v410 = vmax.f32 %v402, 0.0
  %v411 = vmax.f32 %v403, 0.0
  %v412 = vmax.f32 %v404, 0.0
  %v413 = vld [vmem:[%s3] sm:$0xff]
  %v414 = vld [vmem:[%s3 + $0x8] sm:$0xff]
  %v415 = vld [vmem:[%s3 + $0x10] sm:$0xff]
  %v416 = vld [vmem:[%s3 + $0x18] sm:$0xff]
  %vm417 = vcmask 261120
  %v419 = vsel %vm417, %v413, 0
  %v422 = vsel %vm417, %v414, 0
  %v425 = vsel %vm417, %v415, 0
  %v428 = vsel %vm417, %v416, 0
  %430 = vmatprep.subr.mxu0 %v406
  %431 = vmatpush1.msra.mxu0 %v405
  %432 = vmatprep.subr.mxu0 %v408
  %433 = vmatpush1.msra.mxu0 %v407
  %434 = vmatprep.subr.mxu0 %v410
  %435 = vmatpush1.msra.mxu0 %v409
  %436 = vmatprep.subr.mxu0 %v412
  %437 = vmatpush1.msra.mxu0 %v411
  %438 = vmatprep.subr.mxu0 0.0
  %439 = vmatpush1.msra.mxu0 0.0
  %440 = vmatprep.subr.mxu0 0.0
  %441 = vmatpush1.msra.mxu0 0.0
  %442 = vmatprep.subr.mxu0 0.0
  %443 = vmatpush1.msra.mxu0 0.0
  %444 = vmatprep.subr.mxu0 0.0
  %445 = vmatpush1.msra.mxu0 0.0
  %446 = vmatprep.subr.mxu0 0.0
  %447 = vmatpush1.msra.mxu0 0.0
  %448 = vmatprep.subr.mxu0 0.0
  %449 = vmatpush1.msra.mxu0 0.0
  %450 = vmatprep.subr.mxu0 0.0
  %451 = vmatpush1.msra.mxu0 0.0
  %452 = vmatprep.subr.mxu0 0.0
  %453 = vmatpush1.msra.mxu0 0.0
  %454 = vmatprep.subr.mxu0 0.0
  %455 = vmatpush1.msra.mxu0 0.0
  %456 = vmatprep.subr.mxu0 0.0
  %457 = vmatpush1.msra.mxu0 0.0
  %458 = vmatprep.subr.mxu0 0.0
  %459 = vmatpush1.msra.mxu0 0.0
  %460 = vmatprep.subr.mxu0 0.0
  %461 = vmatpush1.msra.mxu0 0.0
  %462 = vmatprep.subr.mxu0 0.0
  %463 = vmatpush1.msra.mxu0 0.0
  %464 = vmatprep.subr.mxu0 0.0
  %465 = vmatpush1.msra.mxu0 0.0
  %466 = vmatprep.subr.mxu0 0.0
  %467 = vmatpush1.msra.mxu0 0.0
  %468 = vmatprep.subr.mxu0 0.0
  %469 = vmatpush1.msra.mxu0 0.0
  %470 = vmatprep.subr.mxu0 0.0
  %471 = vmatpush1.msra.mxu0 0.0
  %472 = vmatprep.subr.mxu0 0.0
  %473 = vmatpush1.msra.mxu0 0.0
  %474 = vmatprep.subr.mxu0 0.0
  %475 = vmatpush1.msra.mxu0 0.0
  %476 = vmatprep.subr.mxu0 0.0
  %477 = vmatpush1.msra.mxu0 0.0
  %478 = vmatprep.subr.mxu0 0.0
  %479 = vmatpush1.msra.mxu0 0.0
  %480 = vmatprep.subr.mxu0 0.0
  %481 = vmatpush1.msra.mxu0 0.0
  %482 = vmatprep.subr.mxu0 0.0
  %483 = vmatpush1.msra.mxu0 0.0
  %484 = vmatprep.subr.mxu0 0.0
  %485 = vmatpush1.msra.mxu0 0.0
  %486 = vmatprep.subr.mxu0 0.0
  %487 = vmatpush1.msra.mxu0 0.0
  %488 = vmatprep.subr.mxu0 0.0
  %489 = vmatpush1.msra.mxu0 0.0
  %490 = vmatprep.subr.mxu0 0.0
  %491 = vmatpush1.msra.mxu0 0.0
  %492 = vmatprep.subr.mxu0 0.0
  %493 = vmatpush1.msra.mxu0 0.0
  %494 = vmatprep.mubr.f32.mxu0 0.0
  %495 = vmatmul.mubr.f32.gmra.mrb[0].mxu0 %v419
  %v496 = vpop.f32.mrb[0].mxu0
  %v497 = vadd.f32 0.0, %v496
  %v498 = vpop.f32.mrb[0].mxu0
  %v499 = vadd.f32 0.0, %v498
  %500 = vmatprep.mubr.f32.mxu0 0.0
  %501 = vmatmul.mubr.f32.gmra.mrb[0].mxu0 %v422
  %v502 = vpop.f32.mrb[0].mxu0
  %v503 = vadd.f32 0.0, %v502
  %v504 = vpop.f32.mrb[0].mxu0
  %v505 = vadd.f32 0.0, %v504
  %506 = vmatprep.mubr.f32.mxu0 0.0
  %507 = vmatmul.mubr.f32.gmra.mrb[0].mxu0 %v425
  %v508 = vpop.f32.mrb[0].mxu0
  %v509 = vadd.f32 0.0, %v508
  %v510 = vpop.f32.mrb[0].mxu0
  %v511 = vadd.f32 0.0, %v510
  %512 = vmatprep.mubr.f32.mxu0 0.0
  %513 = vmatmul.mubr.f32.gmra.mrb[0].mxu0 %v428
  %v514 = vpop.f32.mrb[0].mxu0
  %v515 = vadd.f32 0.0, %v514
  %v516 = vpop.f32.mrb[0].mxu0
  %v517 = vadd.f32 0.0, %v516
  %518 = vdwg.mxu0
  %v519 = vld [vmem:[%s7] sm:$0x3]
  %v520 = vadd.f32 %v497, %v499
  %521 = vadd.xlane.f32.xlu0 %v520
  %v522 = vpop.xlane.xlu0 %521
  %v523 = vadd.f32 %v503, %v505
  %524 = vadd.xlane.f32.xlu0 %v523
  %v525 = vpop.xlane.xlu0 %524
  %v526 = vadd.f32 %v509, %v511
  %527 = vadd.xlane.f32.xlu0 %v526
  %v528 = vpop.xlane.xlu0 %527
  %v529 = vadd.f32 %v515, %v517
  %530 = vadd.xlane.f32.xlu0 %v529
  %v531 = vpop.xlane.xlu0 %530
  %v532 = vmul.f32 %v497, %v497
  %v533 = vmul.f32 %v499, %v499
  %v534 = vmul.f32 %v503, %v503
  %v535 = vmul.f32 %v505, %v505
  %v536 = vmul.f32 %v509, %v509
  %v537 = vmul.f32 %v511, %v511
  %v538 = vmul.f32 %v515, %v515
  %v539 = vmul.f32 %v517, %v517
  %v540 = vadd.f32 %v532, %v533
  %541 = vadd.xlane.f32.xlu0 %v540
  %v542 = vpop.xlane.xlu0 %541
  %v543 = vadd.f32 %v534, %v535
  %544 = vadd.xlane.f32.xlu0 %v543
  %v545 = vpop.xlane.xlu0 %544
  %v546 = vadd.f32 %v536, %v537
  %547 = vadd.xlane.f32.xlu0 %v546
  %v548 = vpop.xlane.xlu0 %547
  %v549 = vadd.f32 %v538, %v539
  %550 = vadd.xlane.f32.xlu0 %v549
  %v551 = vpop.xlane.xlu0 %550
  %v552 = vmul.f32 %v522, 0.00390625
  %v553 = vmul.f32 %v525, 0.00390625
  %v554 = vmul.f32 %v528, 0.00390625
  %v555 = vmul.f32 %v531, 0.00390625
  %v556 = vmul.f32 %v542, 0.00390625
  %v557 = vmul.f32 %v545, 0.00390625
  %v558 = vmul.f32 %v548, 0.00390625
  %v559 = vmul.f32 %v551, 0.00390625
  %v560 = vmul.f32 %v552, %v552
  %v561 = vmul.f32 %v553, %v553
  %v562 = vmul.f32 %v554, %v554
  %v563 = vmul.f32 %v555, %v555
  %v564 = vsub.f32 %v556, %v560
  %v565 = vsub.f32 %v557, %v561
  %v566 = vsub.f32 %v558, %v562
  %v567 = vsub.f32 %v559, %v563
  %v568 = vmax.f32 %v564, 0.0
  %v569 = vmax.f32 %v565, 0.0
  %v570 = vmax.f32 %v566, 0.0
  %v571 = vmax.f32 %v567, 0.0
  %v572 = vlaneseq
  %v573 = vshrl.u32 %v572, 7
  %v574 = vsub.s32 0, %v573
  %v575 = vrot.slane %v519, %v574
  %577 = vbcast.lane.b32.xlu0 %v575, 256
  %v578 = vpop.permute.xlu0 %577
  %s580 = sor.u32 256, 8
  %581 = vbcast.lane.b32.xlu0 %v575, %s580
  %v582 = vpop.permute.xlu0 %581
  %s584 = sor.u32 256, 16
  %585 = vbcast.lane.b32.xlu0 %v575, %s584
  %v586 = vpop.permute.xlu0 %585
  %s588 = sor.u32 256, 24
  %589 = vbcast.lane.b32.xlu0 %v575, %s588
  %v590 = vpop.permute.xlu0 %589
  %v591 = vadd.f32 %v568, 1e-05
  %v592 = vadd.f32 %v569, 1e-05
  %v593 = vadd.f32 %v570, 1e-05
  %v594 = vadd.f32 %v571, 1e-05
  %v595 = vrsqrt.pop %v591
  %v596 = vrsqrt.pop %v592
  %v597 = vrsqrt.pop %v593
  %v598 = vrsqrt.pop %v594
  %v599 = vmul.f32 %v578, %v595
  %v600 = vmul.f32 %v582, %v596
  %v601 = vmul.f32 %v586, %v597
  %v602 = vmul.f32 %v590, %v598
  %v603 = vlaneseq
  %v604 = vshrl.u32 %v603, 7
  %v605 = vsub.s32 1, %v604
  %v606 = vrot.slane %v519, %v605
  %608 = vbcast.lane.b32.xlu0 %v606, 256
  %v609 = vpop.permute.xlu0 %608
  %s611 = sor.u32 256, 8
  %612 = vbcast.lane.b32.xlu0 %v606, %s611
  %v613 = vpop.permute.xlu0 %612
  %s615 = sor.u32 256, 16
  %616 = vbcast.lane.b32.xlu0 %v606, %s615
  %v617 = vpop.permute.xlu0 %616
  %s619 = sor.u32 256, 24
  %620 = vbcast.lane.b32.xlu0 %v606, %s619
  %v621 = vpop.permute.xlu0 %620
  %v622 = vmul.f32 %v552, %v599
  %v623 = vmul.f32 %v553, %v600
  %v624 = vmul.f32 %v554, %v601
  %v625 = vmul.f32 %v555, %v602
  %v626 = vsub.f32 %v609, %v622
  %v627 = vsub.f32 %v613, %v623
  %v628 = vsub.f32 %v617, %v624
  %v629 = vsub.f32 %v621, %v625
  %v630 = vmul.f32 %v497, %v599
  %v631 = vmul.f32 %v499, %v599
  %v632 = vmul.f32 %v503, %v600
  %v633 = vmul.f32 %v505, %v600
  %v634 = vmul.f32 %v509, %v601
  %v635 = vmul.f32 %v511, %v601
  %v636 = vmul.f32 %v515, %v602
  %v637 = vmul.f32 %v517, %v602
  %v638 = vadd.f32 %v630, %v626
  %v639 = vadd.f32 %v631, %v626
  %v640 = vadd.f32 %v632, %v627
  %v641 = vadd.f32 %v633, %v627
  %v642 = vadd.f32 %v634, %v628
  %v643 = vadd.f32 %v635, %v628
  %v644 = vadd.f32 %v636, %v629
  %v645 = vadd.f32 %v637, %v629
  %v646 = vmax.f32 %v638, 0.0
  %v647 = vmax.f32 %v639, 0.0
  %v648 = vmax.f32 %v640, 0.0
  %v649 = vmax.f32 %v641, 0.0
  %v650 = vmax.f32 %v642, 0.0
  %v651 = vmax.f32 %v643, 0.0
  %v652 = vmax.f32 %v644, 0.0
  %v653 = vmax.f32 %v645, 0.0
  %v654 = vld [vmem:[%s4] sm:$0xff]
  %v655 = vld [vmem:[%s4 + $0x8] sm:$0xff]
  %v656 = vld [vmem:[%s4 + $0x10] sm:$0xff]
  %v657 = vld [vmem:[%s4 + $0x18] sm:$0xff]
  %v659 = vsel %vm417, %v654, 0
  %v662 = vsel %vm417, %v655, 0
  %v665 = vsel %vm417, %v656, 0
  %v668 = vsel %vm417, %v657, 0
  %670 = vmatprep.subr.mxu0 %v647
  %671 = vmatpush1.msra.mxu0 %v646
  %672 = vmatprep.subr.mxu0 %v649
  %673 = vmatpush1.msra.mxu0 %v648
  %674 = vmatprep.subr.mxu0 %v651
  %675 = vmatpush1.msra.mxu0 %v650
  %676 = vmatprep.subr.mxu0 %v653
  %677 = vmatpush1.msra.mxu0 %v652
  %678 = vmatprep.subr.mxu0 0.0
  %679 = vmatpush1.msra.mxu0 0.0
  %680 = vmatprep.subr.mxu0 0.0
  %681 = vmatpush1.msra.mxu0 0.0
  %682 = vmatprep.subr.mxu0 0.0
  %683 = vmatpush1.msra.mxu0 0.0
  %684 = vmatprep.subr.mxu0 0.0
  %685 = vmatpush1.msra.mxu0 0.0
  %686 = vmatprep.subr.mxu0 0.0
  %687 = vmatpush1.msra.mxu0 0.0
  %688 = vmatprep.subr.mxu0 0.0
  %689 = vmatpush1.msra.mxu0 0.0
  %690 = vmatprep.subr.mxu0 0.0
  %691 = vmatpush1.msra.mxu0 0.0
  %692 = vmatprep.subr.mxu0 0.0
  %693 = vmatpush1.msra.mxu0 0.0
  %694 = vmatprep.subr.mxu0 0.0
  %695 = vmatpush1.msra.mxu0 0.0
  %696 = vmatprep.subr.mxu0 0.0
  %697 = vmatpush1.msra.mxu0 0.0
  %698 = vmatprep.subr.mxu0 0.0
  %699 = vmatpush1.msra.mxu0 0.0
  %700 = vmatprep.subr.mxu0 0.0
  %701 = vmatpush1.msra.mxu0 0.0
  %702 = vmatprep.subr.mxu0 0.0
  %703 = vmatpush1.msra.mxu0 0.0
  %704 = vmatprep.subr.mxu0 0.0
  %705 = vmatpush1.msra.mxu0 0.0
  %706 = vmatprep.subr.mxu0 0.0
  %707 = vmatpush1.msra.mxu0 0.0
  %708 = vmatprep.subr.mxu0 0.0
  %709 = vmatpush1.msra.mxu0 0.0
  %710 = vmatprep.subr.mxu0 0.0
  %711 = vmatpush1.msra.mxu0 0.0
  %712 = vmatprep.subr.mxu0 0.0
  %713 = vmatpush1.msra.mxu0 0.0
  %714 = vmatprep.subr.mxu0 0.0
  %715 = vmatpush1.msra.mxu0 0.0
  %716 = vmatprep.subr.mxu0 0.0
  %717 = vmatpush1.msra.mxu0 0.0
  %718 = vmatprep.subr.mxu0 0.0
  %719 = vmatpush1.msra.mxu0 0.0
  %720 = vmatprep.subr.mxu0 0.0
  %721 = vmatpush1.msra.mxu0 0.0
  %722 = vmatprep.subr.mxu0 0.0
  %723 = vmatpush1.msra.mxu0 0.0
  %724 = vmatprep.subr.mxu0 0.0
  %725 = vmatpush1.msra.mxu0 0.0
  %726 = vmatprep.subr.mxu0 0.0
  %727 = vmatpush1.msra.mxu0 0.0
  %728 = vmatprep.subr.mxu0 0.0
  %729 = vmatpush1.msra.mxu0 0.0
  %730 = vmatprep.subr.mxu0 0.0
  %731 = vmatpush1.msra.mxu0 0.0
  %732 = vmatprep.subr.mxu0 0.0
  %733 = vmatpush1.msra.mxu0 0.0
  %734 = vmatprep.mubr.f32.mxu0 0.0
  %735 = vmatmul.mubr.f32.gmra.mrb[0].mxu0 %v659
  %v736 = vpop.f32.mrb[0].mxu0
  %v737 = vadd.f32 0.0, %v736
  %v738 = vpop.f32.mrb[0].mxu0
  %v739 = vadd.f32 0.0, %v738
  %740 = vmatprep.mubr.f32.mxu0 0.0
  %741 = vmatmul.mubr.f32.gmra.mrb[0].mxu0 %v662
  %v742 = vpop.f32.mrb[0].mxu0
  %v743 = vadd.f32 0.0, %v742
  %v744 = vpop.f32.mrb[0].mxu0
  %v745 = vadd.f32 0.0, %v744
  %746 = vmatprep.mubr.f32.mxu0 0.0
  %747 = vmatmul.mubr.f32.gmra.mrb[0].mxu0 %v665
  %v748 = vpop.f32.mrb[0].mxu0
  %v749 = vadd.f32 0.0, %v748
  %v750 = vpop.f32.mrb[0].mxu0
  %v751 = vadd.f32 0.0, %v750
  %752 = vmatprep.mubr.f32.mxu0 0.0
  %753 = vmatmul.mubr.f32.gmra.mrb[0].mxu0 %v668
  %v754 = vpop.f32.mrb[0].mxu0
  %v755 = vadd.f32 0.0, %v754
  %v756 = vpop.f32.mrb[0].mxu0
  %v757 = vadd.f32 0.0, %v756
  %758 = vdwg.mxu0
  %s759 = scalar_lea.vmem %s7, 2
  %v760 = vld [vmem:[%s759] sm:$0x3]
  %v761 = vadd.f32 %v737, %v739
  %762 = vadd.xlane.f32.xlu0 %v761
  %v763 = vpop.xlane.xlu0 %762
  %v764 = vadd.f32 %v743, %v745
  %765 = vadd.xlane.f32.xlu0 %v764
  %v766 = vpop.xlane.xlu0 %765
  %v767 = vadd.f32 %v749, %v751
  %768 = vadd.xlane.f32.xlu0 %v767
  %v769 = vpop.xlane.xlu0 %768
  %v770 = vadd.f32 %v755, %v757
  %771 = vadd.xlane.f32.xlu0 %v770
  %v772 = vpop.xlane.xlu0 %771
  %v773 = vmul.f32 %v737, %v737
  %v774 = vmul.f32 %v739, %v739
  %v775 = vmul.f32 %v743, %v743
  %v776 = vmul.f32 %v745, %v745
  %v777 = vmul.f32 %v749, %v749
  %v778 = vmul.f32 %v751, %v751
  %v779 = vmul.f32 %v755, %v755
  %v780 = vmul.f32 %v757, %v757
  %v781 = vadd.f32 %v773, %v774
  %782 = vadd.xlane.f32.xlu0 %v781
  %v783 = vpop.xlane.xlu0 %782
  %v784 = vadd.f32 %v775, %v776
  %785 = vadd.xlane.f32.xlu0 %v784
  %v786 = vpop.xlane.xlu0 %785
  %v787 = vadd.f32 %v777, %v778
  %788 = vadd.xlane.f32.xlu0 %v787
  %v789 = vpop.xlane.xlu0 %788
  %v790 = vadd.f32 %v779, %v780
  %791 = vadd.xlane.f32.xlu0 %v790
  %v792 = vpop.xlane.xlu0 %791
  %v793 = vmul.f32 %v763, 0.00390625
  %v794 = vmul.f32 %v766, 0.00390625
  %v795 = vmul.f32 %v769, 0.00390625
  %v796 = vmul.f32 %v772, 0.00390625
  %v797 = vmul.f32 %v783, 0.00390625
  %v798 = vmul.f32 %v786, 0.00390625
  %v799 = vmul.f32 %v789, 0.00390625
  %v800 = vmul.f32 %v792, 0.00390625
  %v801 = vmul.f32 %v793, %v793
  %v802 = vmul.f32 %v794, %v794
  %v803 = vmul.f32 %v795, %v795
  %v804 = vmul.f32 %v796, %v796
  %v805 = vsub.f32 %v797, %v801
  %v806 = vsub.f32 %v798, %v802
  %v807 = vsub.f32 %v799, %v803
  %v808 = vsub.f32 %v800, %v804
  %v809 = vmax.f32 %v805, 0.0
  %v810 = vmax.f32 %v806, 0.0
  %v811 = vmax.f32 %v807, 0.0
  %v812 = vmax.f32 %v808, 0.0
  %v813 = vlaneseq
  %v814 = vshrl.u32 %v813, 7
  %v815 = vsub.s32 0, %v814
  %v816 = vrot.slane %v760, %v815
  %818 = vbcast.lane.b32.xlu0 %v816, 256
  %v819 = vpop.permute.xlu0 %818
  %s821 = sor.u32 256, 8
  %822 = vbcast.lane.b32.xlu0 %v816, %s821
  %v823 = vpop.permute.xlu0 %822
  %s825 = sor.u32 256, 16
  %826 = vbcast.lane.b32.xlu0 %v816, %s825
  %v827 = vpop.permute.xlu0 %826
  %s829 = sor.u32 256, 24
  %830 = vbcast.lane.b32.xlu0 %v816, %s829
  %v831 = vpop.permute.xlu0 %830
  %v832 = vadd.f32 %v809, 1e-05
  %v833 = vadd.f32 %v810, 1e-05
  %v834 = vadd.f32 %v811, 1e-05
  %v835 = vadd.f32 %v812, 1e-05
  %v836 = vrsqrt.pop %v832
  %v837 = vrsqrt.pop %v833
  %v838 = vrsqrt.pop %v834
  %v839 = vrsqrt.pop %v835
  %v840 = vmul.f32 %v819, %v836
  %v841 = vmul.f32 %v823, %v837
  %v842 = vmul.f32 %v827, %v838
  %v843 = vmul.f32 %v831, %v839
  %v844 = vlaneseq
  %v845 = vshrl.u32 %v844, 7
  %v846 = vsub.s32 1, %v845
  %v847 = vrot.slane %v760, %v846
  %849 = vbcast.lane.b32.xlu0 %v847, 256
  %v850 = vpop.permute.xlu0 %849
  %s852 = sor.u32 256, 8
  %853 = vbcast.lane.b32.xlu0 %v847, %s852
  %v854 = vpop.permute.xlu0 %853
  %s856 = sor.u32 256, 16
  %857 = vbcast.lane.b32.xlu0 %v847, %s856
  %v858 = vpop.permute.xlu0 %857
  %s860 = sor.u32 256, 24
  %861 = vbcast.lane.b32.xlu0 %v847, %s860
  %v862 = vpop.permute.xlu0 %861
  %v863 = vmul.f32 %v793, %v840
  %v864 = vmul.f32 %v794, %v841
  %v865 = vmul.f32 %v795, %v842
  %v866 = vmul.f32 %v796, %v843
  %v867 = vsub.f32 %v850, %v863
  %v868 = vsub.f32 %v854, %v864
  %v869 = vsub.f32 %v858, %v865
  %v870 = vsub.f32 %v862, %v866
  %v871 = vmul.f32 %v737, %v840
  %v872 = vmul.f32 %v739, %v840
  %v873 = vmul.f32 %v743, %v841
  %v874 = vmul.f32 %v745, %v841
  %v875 = vmul.f32 %v749, %v842
  %v876 = vmul.f32 %v751, %v842
  %v877 = vmul.f32 %v755, %v843
  %v878 = vmul.f32 %v757, %v843
  %v879 = vadd.f32 %v871, %v867
  %v880 = vadd.f32 %v872, %v867
  %v881 = vadd.f32 %v873, %v868
  %v882 = vadd.f32 %v874, %v868
  %v883 = vadd.f32 %v875, %v869
  %v884 = vadd.f32 %v876, %v869
  %v885 = vadd.f32 %v877, %v870
  %v886 = vadd.f32 %v878, %v870
  %v887 = vmax.f32 %v879, 0.0
  %v888 = vmax.f32 %v880, 0.0
  %v889 = vmax.f32 %v881, 0.0
  %v890 = vmax.f32 %v882, 0.0
  %v891 = vmax.f32 %v883, 0.0
  %v892 = vmax.f32 %v884, 0.0
  %v893 = vmax.f32 %v885, 0.0
  %v894 = vmax.f32 %v886, 0.0
  %s895 = scalar_lea.vmem %s4, 32
  %v896 = vld [vmem:[%s895] sm:$0xff]
  %v897 = vld [vmem:[%s895 + $0x8] sm:$0xff]
  %v898 = vld [vmem:[%s895 + $0x10] sm:$0xff]
  %v899 = vld [vmem:[%s895 + $0x18] sm:$0xff]
  %v901 = vsel %vm417, %v896, 0
  %v904 = vsel %vm417, %v897, 0
  %v907 = vsel %vm417, %v898, 0
  %v910 = vsel %vm417, %v899, 0
  %912 = vmatprep.subr.mxu0 %v888
  %913 = vmatpush1.msra.mxu0 %v887
  %914 = vmatprep.subr.mxu0 %v890
  %915 = vmatpush1.msra.mxu0 %v889
  %916 = vmatprep.subr.mxu0 %v892
  %917 = vmatpush1.msra.mxu0 %v891
  %918 = vmatprep.subr.mxu0 %v894
  %919 = vmatpush1.msra.mxu0 %v893
  %920 = vmatprep.subr.mxu0 0.0
  %921 = vmatpush1.msra.mxu0 0.0
  %922 = vmatprep.subr.mxu0 0.0
  %923 = vmatpush1.msra.mxu0 0.0
  %924 = vmatprep.subr.mxu0 0.0
  %925 = vmatpush1.msra.mxu0 0.0
  %926 = vmatprep.subr.mxu0 0.0
  %927 = vmatpush1.msra.mxu0 0.0
  %928 = vmatprep.subr.mxu0 0.0
  %929 = vmatpush1.msra.mxu0 0.0
  %930 = vmatprep.subr.mxu0 0.0
  %931 = vmatpush1.msra.mxu0 0.0
  %932 = vmatprep.subr.mxu0 0.0
  %933 = vmatpush1.msra.mxu0 0.0
  %934 = vmatprep.subr.mxu0 0.0
  %935 = vmatpush1.msra.mxu0 0.0
  %936 = vmatprep.subr.mxu0 0.0
  %937 = vmatpush1.msra.mxu0 0.0
  %938 = vmatprep.subr.mxu0 0.0
  %939 = vmatpush1.msra.mxu0 0.0
  %940 = vmatprep.subr.mxu0 0.0
  %941 = vmatpush1.msra.mxu0 0.0
  %942 = vmatprep.subr.mxu0 0.0
  %943 = vmatpush1.msra.mxu0 0.0
  %944 = vmatprep.subr.mxu0 0.0
  %945 = vmatpush1.msra.mxu0 0.0
  %946 = vmatprep.subr.mxu0 0.0
  %947 = vmatpush1.msra.mxu0 0.0
  %948 = vmatprep.subr.mxu0 0.0
  %949 = vmatpush1.msra.mxu0 0.0
  %950 = vmatprep.subr.mxu0 0.0
  %951 = vmatpush1.msra.mxu0 0.0
  %952 = vmatprep.subr.mxu0 0.0
  %953 = vmatpush1.msra.mxu0 0.0
  %954 = vmatprep.subr.mxu0 0.0
  %955 = vmatpush1.msra.mxu0 0.0
  %956 = vmatprep.subr.mxu0 0.0
  %957 = vmatpush1.msra.mxu0 0.0
  %958 = vmatprep.subr.mxu0 0.0
  %959 = vmatpush1.msra.mxu0 0.0
  %960 = vmatprep.subr.mxu0 0.0
  %961 = vmatpush1.msra.mxu0 0.0
  %962 = vmatprep.subr.mxu0 0.0
  %963 = vmatpush1.msra.mxu0 0.0
  %964 = vmatprep.subr.mxu0 0.0
  %965 = vmatpush1.msra.mxu0 0.0
  %966 = vmatprep.subr.mxu0 0.0
  %967 = vmatpush1.msra.mxu0 0.0
  %968 = vmatprep.subr.mxu0 0.0
  %969 = vmatpush1.msra.mxu0 0.0
  %970 = vmatprep.subr.mxu0 0.0
  %971 = vmatpush1.msra.mxu0 0.0
  %972 = vmatprep.subr.mxu0 0.0
  %973 = vmatpush1.msra.mxu0 0.0
  %974 = vmatprep.subr.mxu0 0.0
  %975 = vmatpush1.msra.mxu0 0.0
  %976 = vmatprep.mubr.f32.mxu0 0.0
  %977 = vmatmul.mubr.f32.gmra.mrb[0].mxu0 %v901
  %v978 = vpop.f32.mrb[0].mxu0
  %v979 = vadd.f32 0.0, %v978
  %v980 = vpop.f32.mrb[0].mxu0
  %v981 = vadd.f32 0.0, %v980
  %982 = vmatprep.mubr.f32.mxu0 0.0
  %983 = vmatmul.mubr.f32.gmra.mrb[0].mxu0 %v904
  %v984 = vpop.f32.mrb[0].mxu0
  %v985 = vadd.f32 0.0, %v984
  %v986 = vpop.f32.mrb[0].mxu0
  %v987 = vadd.f32 0.0, %v986
  %988 = vmatprep.mubr.f32.mxu0 0.0
  %989 = vmatmul.mubr.f32.gmra.mrb[0].mxu0 %v907
  %v990 = vpop.f32.mrb[0].mxu0
  %v991 = vadd.f32 0.0, %v990
  %v992 = vpop.f32.mrb[0].mxu0
  %v993 = vadd.f32 0.0, %v992
  %994 = vmatprep.mubr.f32.mxu0 0.0
  %995 = vmatmul.mubr.f32.gmra.mrb[0].mxu0 %v910
  %v996 = vpop.f32.mrb[0].mxu0
  %v997 = vadd.f32 0.0, %v996
  %v998 = vpop.f32.mrb[0].mxu0
  %v999 = vadd.f32 0.0, %v998
  %1000 = vdwg.mxu0
  %s1001 = scalar_lea.vmem %s7, 4
  %v1002 = vld [vmem:[%s1001] sm:$0x3]
  %v1003 = vadd.f32 %v979, %v981
  %1004 = vadd.xlane.f32.xlu0 %v1003
  %v1005 = vpop.xlane.xlu0 %1004
  %v1006 = vadd.f32 %v985, %v987
  %1007 = vadd.xlane.f32.xlu0 %v1006
  %v1008 = vpop.xlane.xlu0 %1007
  %v1009 = vadd.f32 %v991, %v993
  %1010 = vadd.xlane.f32.xlu0 %v1009
  %v1011 = vpop.xlane.xlu0 %1010
  %v1012 = vadd.f32 %v997, %v999
  %1013 = vadd.xlane.f32.xlu0 %v1012
  %v1014 = vpop.xlane.xlu0 %1013
  %v1015 = vmul.f32 %v979, %v979
  %v1016 = vmul.f32 %v981, %v981
  %v1017 = vmul.f32 %v985, %v985
  %v1018 = vmul.f32 %v987, %v987
  %v1019 = vmul.f32 %v991, %v991
  %v1020 = vmul.f32 %v993, %v993
  %v1021 = vmul.f32 %v997, %v997
  %v1022 = vmul.f32 %v999, %v999
  %v1023 = vadd.f32 %v1015, %v1016
  %1024 = vadd.xlane.f32.xlu0 %v1023
  %v1025 = vpop.xlane.xlu0 %1024
  %v1026 = vadd.f32 %v1017, %v1018
  %1027 = vadd.xlane.f32.xlu0 %v1026
  %v1028 = vpop.xlane.xlu0 %1027
  %v1029 = vadd.f32 %v1019, %v1020
  %1030 = vadd.xlane.f32.xlu0 %v1029
  %v1031 = vpop.xlane.xlu0 %1030
  %v1032 = vadd.f32 %v1021, %v1022
  %1033 = vadd.xlane.f32.xlu0 %v1032
  %v1034 = vpop.xlane.xlu0 %1033
  %v1035 = vmul.f32 %v1005, 0.00390625
  %v1036 = vmul.f32 %v1008, 0.00390625
  %v1037 = vmul.f32 %v1011, 0.00390625
  %v1038 = vmul.f32 %v1014, 0.00390625
  %v1039 = vmul.f32 %v1025, 0.00390625
  %v1040 = vmul.f32 %v1028, 0.00390625
  %v1041 = vmul.f32 %v1031, 0.00390625
  %v1042 = vmul.f32 %v1034, 0.00390625
  %v1043 = vmul.f32 %v1035, %v1035
  %v1044 = vmul.f32 %v1036, %v1036
  %v1045 = vmul.f32 %v1037, %v1037
  %v1046 = vmul.f32 %v1038, %v1038
  %v1047 = vsub.f32 %v1039, %v1043
  %v1048 = vsub.f32 %v1040, %v1044
  %v1049 = vsub.f32 %v1041, %v1045
  %v1050 = vsub.f32 %v1042, %v1046
  %v1051 = vmax.f32 %v1047, 0.0
  %v1052 = vmax.f32 %v1048, 0.0
  %v1053 = vmax.f32 %v1049, 0.0
  %v1054 = vmax.f32 %v1050, 0.0
  %v1055 = vlaneseq
  %v1056 = vshrl.u32 %v1055, 7
  %v1057 = vsub.s32 0, %v1056
  %v1058 = vrot.slane %v1002, %v1057
  %1060 = vbcast.lane.b32.xlu0 %v1058, 256
  %v1061 = vpop.permute.xlu0 %1060
  %s1063 = sor.u32 256, 8
  %1064 = vbcast.lane.b32.xlu0 %v1058, %s1063
  %v1065 = vpop.permute.xlu0 %1064
  %s1067 = sor.u32 256, 16
  %1068 = vbcast.lane.b32.xlu0 %v1058, %s1067
  %v1069 = vpop.permute.xlu0 %1068
  %s1071 = sor.u32 256, 24
  %1072 = vbcast.lane.b32.xlu0 %v1058, %s1071
  %v1073 = vpop.permute.xlu0 %1072
  %v1074 = vadd.f32 %v1051, 1e-05
  %v1075 = vadd.f32 %v1052, 1e-05
  %v1076 = vadd.f32 %v1053, 1e-05
  %v1077 = vadd.f32 %v1054, 1e-05
  %v1078 = vrsqrt.pop %v1074
  %v1079 = vrsqrt.pop %v1075
  %v1080 = vrsqrt.pop %v1076
  %v1081 = vrsqrt.pop %v1077
  %v1082 = vmul.f32 %v1061, %v1078
  %v1083 = vmul.f32 %v1065, %v1079
  %v1084 = vmul.f32 %v1069, %v1080
  %v1085 = vmul.f32 %v1073, %v1081
  %v1086 = vlaneseq
  %v1087 = vshrl.u32 %v1086, 7
  %v1088 = vsub.s32 1, %v1087
  %v1089 = vrot.slane %v1002, %v1088
  %1091 = vbcast.lane.b32.xlu0 %v1089, 256
  %v1092 = vpop.permute.xlu0 %1091
  %s1094 = sor.u32 256, 8
  %1095 = vbcast.lane.b32.xlu0 %v1089, %s1094
  %v1096 = vpop.permute.xlu0 %1095
  %s1098 = sor.u32 256, 16
  %1099 = vbcast.lane.b32.xlu0 %v1089, %s1098
  %v1100 = vpop.permute.xlu0 %1099
  %s1102 = sor.u32 256, 24
  %1103 = vbcast.lane.b32.xlu0 %v1089, %s1102
  %v1104 = vpop.permute.xlu0 %1103
  %v1105 = vmul.f32 %v1035, %v1082
  %v1106 = vmul.f32 %v1036, %v1083
  %v1107 = vmul.f32 %v1037, %v1084
  %v1108 = vmul.f32 %v1038, %v1085
  %v1109 = vsub.f32 %v1092, %v1105
  %v1110 = vsub.f32 %v1096, %v1106
  %v1111 = vsub.f32 %v1100, %v1107
  %v1112 = vsub.f32 %v1104, %v1108
  %v1113 = vmul.f32 %v979, %v1082
  %v1114 = vmul.f32 %v981, %v1082
  %v1115 = vmul.f32 %v985, %v1083
  %v1116 = vmul.f32 %v987, %v1083
  %v1117 = vmul.f32 %v991, %v1084
  %v1118 = vmul.f32 %v993, %v1084
  %v1119 = vmul.f32 %v997, %v1085
  %v1120 = vmul.f32 %v999, %v1085
  %v1121 = vadd.f32 %v1113, %v1109
  %v1122 = vadd.f32 %v1114, %v1109
  %v1123 = vadd.f32 %v1115, %v1110
  %v1124 = vadd.f32 %v1116, %v1110
  %v1125 = vadd.f32 %v1117, %v1111
  %v1126 = vadd.f32 %v1118, %v1111
  %v1127 = vadd.f32 %v1119, %v1112
  %v1128 = vadd.f32 %v1120, %v1112
  %v1129 = vmax.f32 %v1121, 0.0
  %v1130 = vmax.f32 %v1122, 0.0
  %v1131 = vmax.f32 %v1123, 0.0
  %v1132 = vmax.f32 %v1124, 0.0
  %v1133 = vmax.f32 %v1125, 0.0
  %v1134 = vmax.f32 %v1126, 0.0
  %v1135 = vmax.f32 %v1127, 0.0
  %v1136 = vmax.f32 %v1128, 0.0
  %v1137 = vld [vmem:[%s5] sm:$0x7]
  %v1138 = vld [vmem:[%s8] sm:$0x7]
  %1140 = vset.pattern.permute.xlu0 0
  %1141 = vperm.xlu0 %1140, %v1138
  %v1142 = vpop.permute.xlu0 %1141
  %v1145 = vsel %vm417, %v1137, 0
  %1147 = vmatprep.subr.mxu0 %v1130
  %1148 = vmatpush1.msra.mxu0 %v1129
  %1149 = vmatprep.subr.mxu0 %v1132
  %1150 = vmatpush1.msra.mxu0 %v1131
  %1151 = vmatprep.subr.mxu0 %v1134
  %1152 = vmatpush1.msra.mxu0 %v1133
  %1153 = vmatprep.subr.mxu0 %v1136
  %1154 = vmatpush1.msra.mxu0 %v1135
  %1155 = vmatprep.subr.mxu0 0.0
  %1156 = vmatpush1.msra.mxu0 0.0
  %1157 = vmatprep.subr.mxu0 0.0
  %1158 = vmatpush1.msra.mxu0 0.0
  %1159 = vmatprep.subr.mxu0 0.0
  %1160 = vmatpush1.msra.mxu0 0.0
  %1161 = vmatprep.subr.mxu0 0.0
  %1162 = vmatpush1.msra.mxu0 0.0
  %1163 = vmatprep.subr.mxu0 0.0
  %1164 = vmatpush1.msra.mxu0 0.0
  %1165 = vmatprep.subr.mxu0 0.0
  %1166 = vmatpush1.msra.mxu0 0.0
  %1167 = vmatprep.subr.mxu0 0.0
  %1168 = vmatpush1.msra.mxu0 0.0
  %1169 = vmatprep.subr.mxu0 0.0
  %1170 = vmatpush1.msra.mxu0 0.0
  %1171 = vmatprep.subr.mxu0 0.0
  %1172 = vmatpush1.msra.mxu0 0.0
  %1173 = vmatprep.subr.mxu0 0.0
  %1174 = vmatpush1.msra.mxu0 0.0
  %1175 = vmatprep.subr.mxu0 0.0
  %1176 = vmatpush1.msra.mxu0 0.0
  %1177 = vmatprep.subr.mxu0 0.0
  %1178 = vmatpush1.msra.mxu0 0.0
  %1179 = vmatprep.subr.mxu0 0.0
  %1180 = vmatpush1.msra.mxu0 0.0
  %1181 = vmatprep.subr.mxu0 0.0
  %1182 = vmatpush1.msra.mxu0 0.0
  %1183 = vmatprep.subr.mxu0 0.0
  %1184 = vmatpush1.msra.mxu0 0.0
  %1185 = vmatprep.subr.mxu0 0.0
  %1186 = vmatpush1.msra.mxu0 0.0
  %1187 = vmatprep.subr.mxu0 0.0
  %1188 = vmatpush1.msra.mxu0 0.0
  %1189 = vmatprep.subr.mxu0 0.0
  %1190 = vmatpush1.msra.mxu0 0.0
  %1191 = vmatprep.subr.mxu0 0.0
  %1192 = vmatpush1.msra.mxu0 0.0
  %1193 = vmatprep.subr.mxu0 0.0
  %1194 = vmatpush1.msra.mxu0 0.0
  %1195 = vmatprep.subr.mxu0 0.0
  %1196 = vmatpush1.msra.mxu0 0.0
  %1197 = vmatprep.subr.mxu0 0.0
  %1198 = vmatpush1.msra.mxu0 0.0
  %1199 = vmatprep.subr.mxu0 0.0
  %1200 = vmatpush1.msra.mxu0 0.0
  %1201 = vmatprep.subr.mxu0 0.0
  %1202 = vmatpush1.msra.mxu0 0.0
  %1203 = vmatprep.subr.mxu0 0.0
  %1204 = vmatpush1.msra.mxu0 0.0
  %1205 = vmatprep.subr.mxu0 0.0
  %1206 = vmatpush1.msra.mxu0 0.0
  %1207 = vmatprep.subr.mxu0 0.0
  %1208 = vmatpush1.msra.mxu0 0.0
  %1209 = vmatprep.subr.mxu0 0.0
  %1210 = vmatpush1.msra.mxu0 0.0
  %1211 = vmatprep.mubr.f32.mxu0 0.0
  %1212 = vmatmul.mubr.f32.gmra.mrb[0].mxu0 %v1145
  %v1213 = vpop.f32.mrb[0].mxu0
  %v1214 = vadd.f32 %v1142, %v1213
  %v1215 = vpop.f32.mrb[0].mxu0
  %v1216 = vadd.f32 %v1142, %v1215
  %1217 = vdwg.mxu0
  %1218 = vst [vmem:[%s9] sm:$0x7] %v1214
  %s1219 = scalar_lea.vmem %s9, 4
  %1220 = vst [vmem:[%s1219] sm:$0x7] %v1216
  // Predicated region
  $region38: #{tpu_custom_call.1} parent=0 // pred_check
    _
  $region39: #{tpu_custom_call.1} parent=0 // pred_check_branch
    %1222 = sbr.rel (0) target = $region41
  $region40: #{tpu_custom_call.1} parent=0 // pred_region
    _
  $region41: #{tpu_custom_call.1} parent=0 // pred_fallthru
    _
  // Predicated region
  $region42: #{tpu_custom_call.1} parent=0 // pred_check
    _
  $region43: #{tpu_custom_call.1} parent=0 // pred_check_branch
    %1224 = sbr.rel (0) target = $region45
  $region44: #{tpu_custom_call.1} parent=0 // pred_region
    _
  $region45: #{tpu_custom_call.1} parent=0 // pred_fallthru
    _

</llo_original>
